<compile_context>
chip_gen: v7x
topology: tpu7x:2x2x1
jax: 0.10.0
libtpu: 0.0.40
codegen_flags: <defaults>
</compile_context>

<pallas_src>
import functools

import jax
import jax.numpy as jnp
from jax.experimental import pallas as pl
from jax.experimental.pallas import tpu as pltpu


def _round_up(x, m):
    return (x + m - 1) // m * m


def _pick_tile(n, window_size=None):
    # Large q tiles amortize grid-step overhead; for windowed attention a
    # smaller tile keeps the kv slab (Tq + window) tight.
    prefs = (256, 128, 64, 32, 16, 8) if window_size is None else (128, 64, 32, 16, 8)
    for t in prefs:
        if t <= n and n % t == 0:
            return t
    return n


def _vmem_budget_bytes(B, N, C, H, D, Tq, kv_len):
    bf16 = 2
    x_block = 2 * N * C * bf16                       # double-buffered x (per b)
    weights = 2 * (3 * H * C * D + H * D * C) * bf16  # resident (2 bufs each)
    kv_scratch = 2 * H * N * D * bf16                 # K and V scratch
    out_block = 2 * Tq * C * 4
    work = 4 * Tq * max(kv_len, 128) * 4              # score/prob temporaries
    total = x_block + weights + kv_scratch + out_block + work + (4 << 20)
    return int(min(max(total, 32 << 20), 112 << 20))


# ---------------------------------------------------------------------------
# Fused kernel: QKV projection + (windowed) softmax attention + output
# projection.  grid = (B, n_q_tiles).  K/V for all heads of batch element b
# are built into VMEM scratch at qi == 0 and reused across the q tiles.
# ---------------------------------------------------------------------------
def _fused_attention_kernel(x_ref, wq_ref, wk_ref, wv_ref, wp_ref, b_ref,
                            o_ref, k_sc, v_sc, *,
                            num_heads, seq_len, q_tile, kv_len, window_half,
                            scale):
    H = num_heads
    N = seq_len
    Tq = q_tile
    L = kv_len
    qi = pl.program_id(1)

    # ---- build K/V for every head of this batch element once -------------
    @pl.when(qi == 0)
    def _build_kv():
        xb = x_ref[0]                                       # (N, C) bf16
        for h in range(H):
            k_sc[h] = jnp.dot(xb, wk_ref[h],
                              preferred_element_type=jnp.float32
                              ).astype(k_sc.dtype)
            v_sc[h] = jnp.dot(xb, wv_ref[h],
                              preferred_element_type=jnp.float32
                              ).astype(v_sc.dtype)

    r0 = pl.multiple_of(qi * Tq, Tq)
    xq = x_ref[0, pl.ds(r0, Tq), :]                         # (Tq, C) bf16

    # ---- kv slab start (band-limited when windowed, whole seq otherwise) --
    if window_half is None or L >= N:
        ks = 0
    else:
        desired = r0 - window_half
        aligned = (desired // 8) * 8                        # align to sublane
        ks = jnp.clip(aligned, 0, N - L)
        ks = pl.multiple_of(ks, 8)

    C_out = o_ref.shape[-1]
    acc = jnp.zeros((Tq, C_out), jnp.float32)

    for h in range(H):
        # q projection for this head; scale applied in f32 (not folded into
        # the bf16 weights) to keep rounding close to the reference.
        q_h = jnp.dot(xq, wq_ref[h], preferred_element_type=jnp.float32)
        q_h = (q_h * scale).astype(jnp.bfloat16)            # (Tq, D)

        k_h = k_sc[h, pl.ds(ks, L), :]                      # (L, D) bf16
        v_h = v_sc[h, pl.ds(ks, L), :]                      # (L, D) bf16

        # scores in f32
        s = jax.lax.dot_general(q_h, k_h, (((1,), (1,)), ((), ())),
                                preferred_element_type=jnp.float32)  # (Tq, L)

        if window_half is not None:
            rows = r0 + jax.lax.broadcasted_iota(jnp.int32, (Tq, L), 0)
            cols = ks + jax.lax.broadcasted_iota(jnp.int32, (Tq, L), 1)
            in_win = jnp.abs(rows - cols) <= window_half
            # mask BEFORE the row max: out-of-window logits never contribute.
            s = jnp.where(in_win, s, jnp.float32(-1e30))

        m = jnp.max(s, axis=-1, keepdims=True)
        p = jnp.exp(s - m)
        denom = jnp.sum(p, axis=-1, keepdims=True)
        # exact divide (no approx reciprocal); odd window always keeps the
        # diagonal, so denom > 0 and the reference's nan_to_num is a no-op.
        ctx = jnp.dot(p.astype(jnp.bfloat16), v_h,
                      preferred_element_type=jnp.float32) / denom    # (Tq, D)

        # fused output projection: accumulate this head's contribution.
        acc = acc + jnp.dot(ctx.astype(jnp.bfloat16), wp_ref[h],
                            preferred_element_type=jnp.float32)

    o_ref[0] = (acc + b_ref[...]).astype(o_ref.dtype)


# ---------------------------------------------------------------------------
# Wrapper
# ---------------------------------------------------------------------------
def attention_pallas(x, w_qkv, w_proj, b_proj, *, num_heads, window_size=None,
                     q_tile=None):
    B, N, C = x.shape
    H = num_heads
    assert C % H == 0, "dim must be divisible by num_heads"
    D = C // H
    scale = D ** (-0.5)

    if window_size is not None:
        if not isinstance(window_size, int) or window_size <= 0 or window_size % 2 == 0:
            raise ValueError("window_size must be a positive odd integer")
        window_half = window_size // 2
    else:
        window_half = None

    Tq = q_tile if q_tile is not None else _pick_tile(N, window_size)
    assert N % Tq == 0, "sequence length must be divisible by the q tile"
    assert Tq % 8 == 0 or Tq == N
    n_q = N // Tq

    if window_half is None:
        L = N
    else:
        L = min(N, _round_up(Tq + 2 * window_half, 8) + 8)   # band slab length

    # --- one-time weight layout work ---------------------------------------
    # nn.Linear qkv: w_qkv is (3C, C); rows [0:C]=Wq, [C:2C]=Wk, [2C:3C]=Wv,
    # each row block ordered as (head, head_dim).
    def _per_head(w_rows):                                   # (C, C) -> (H, C, D)
        return w_rows.reshape(H, D, C).transpose(0, 2, 1)

    wq = _per_head(w_qkv[0 * C:1 * C]).astype(jnp.bfloat16)
    wk = _per_head(w_qkv[1 * C:2 * C]).astype(jnp.bfloat16)
    wv = _per_head(w_qkv[2 * C:3 * C]).astype(jnp.bfloat16)
    # TODO(synk): qkv_bias=True variant not implemented (module default False).

    # proj: (C_out, C_in) -> per-head input slice (H, D, C_out)
    wp = w_proj.reshape(C, H, D).transpose(1, 2, 0).astype(jnp.bfloat16)
    bp = b_proj.reshape(1, C).astype(jnp.float32)

    xb = x.astype(jnp.bfloat16)                              # MXU operand dtype

    kernel = functools.partial(
        _fused_attention_kernel, num_heads=H, seq_len=N, q_tile=Tq,
        kv_len=L, window_half=window_half, scale=scale)

    out = pl.pallas_call(
        kernel,
        out_shape=jax.ShapeDtypeStruct((B, N, C), x.dtype),
        grid_spec=pltpu.PrefetchScalarGridSpec(
            num_scalar_prefetch=0,
            grid=(B, n_q),
            in_specs=[
                # full-sequence x per batch element (re-DMA'd only when b changes)
                pl.BlockSpec((1, N, C), lambda b, q: (b, 0, 0)),
                # resident weights: constant index map -> fetched once
                pl.BlockSpec((H, C, D), lambda b, q: (0, 0, 0)),
                pl.BlockSpec((H, C, D), lambda b, q: (0, 0, 0)),
                pl.BlockSpec((H, C, D), lambda b, q: (0, 0, 0)),
                pl.BlockSpec((H, D, C), lambda b, q: (0, 0, 0)),
                pl.BlockSpec((1, C), lambda b, q: (0, 0)),
            ],
            out_specs=pl.BlockSpec((1, Tq, C), lambda b, q: (b, q, 0)),
            scratch_shapes=[
                pltpu.VMEM((H, N, D), jnp.bfloat16),   # K (all heads, per b)
                pltpu.VMEM((H, N, D), jnp.bfloat16),   # V (all heads, per b)
            ],
        ),
        compiler_params=pltpu.CompilerParams(
            # q-tile axis is "arbitrary": K/V scratch is carried across it.
            dimension_semantics=("parallel", "arbitrary"),
            vmem_limit_bytes=_vmem_budget_bytes(B, N, C, H, D, Tq, L)),
    )(xb, wq, wk, wv, wp, bp)

    # TODO(synk): attn_drop / proj_drop are p=0.0 (eval) -> identity, omitted.
    # TODO(synk): packing 2 heads (D=64) per MXU pass for full 256-lane fill on
    # v6e/v7x is a further micro-opt not implemented here.
    return out


def attention_ref(x, w_qkv, w_proj, b_proj, *, num_heads, window_size=None):
    """Pure-JAX f32 reference mirroring the PyTorch forward."""
    B, N, C = x.shape
    H = num_heads
    D = C // H
    qkv = jnp.einsum('bnc,oc->bno', x, w_qkv)
    qkv = qkv.reshape(B, N, 3, H, D).transpose(2, 0, 3, 1, 4)
    q, k, v = qkv[0], qkv[1], qkv[2]
    attn = jnp.einsum('bhnd,bhmd->bhnm', q, k) * (D ** -0.5)
    if window_size is not None:
        idx = jnp.arange(N)
        mask = jnp.abs(idx[:, None] - idx[None, :]) <= window_size // 2
        attn = jnp.where(mask[None, None], attn, -jnp.inf)
    attn = jax.nn.softmax(attn, axis=-1)
    attn = jnp.nan_to_num(attn)
    out = jnp.einsum('bhnm,bhmd->bhnd', attn, v)
    out = out.transpose(0, 2, 1, 3).reshape(B, N, C)
    return jnp.einsum('bnc,oc->bno', out, w_proj) + b_proj


if __name__ == "__main__":
    key = jax.random.PRNGKey(0)
    ok = True
    configs = [
        # (B,  N,   C, H, window_size, q_tile)
        (2,  16,  32, 4,    5, None),   # single q tile, windowed
        (2,  16,  32, 4, None, None),   # single q tile, full attention
        (1, 128,  32, 4,   31,   32),   # multi-tile windowed: band-limited kv slab
        (2, 128,  64, 4, None,   32),   # multi-tile full: resident K/V reuse
    ]
    for (B, N, C, H, ws, tile) in configs:
        k0, k1, k2, k3, key = jax.random.split(key, 5)
        x = jax.random.normal(k0, (B, N, C), dtype=jnp.float32)
        w_qkv = jax.random.normal(k1, (3 * C, C), dtype=jnp.float32) * 0.02
        w_proj = jax.random.normal(k2, (C, C), dtype=jnp.float32) * 0.02
        b_proj = jax.random.normal(k3, (C,), dtype=jnp.float32) * 0.02

        out = attention_pallas(x, w_qkv, w_proj, b_proj, num_heads=H,
                               window_size=ws, q_tile=tile)
        out = jax.block_until_ready(out)
        ref = attention_ref(x, w_qkv, w_proj, b_proj, num_heads=H,
                            window_size=ws)
        # bf16 MXU operands vs f32 reference -> modest tolerance
        ok = ok and bool(jnp.allclose(out, ref, atol=3e-3, rtol=2e-2))

    print("KERNEL_OK" if ok else "KERNEL_MISMATCH")
</pallas_src>

<mosaic_0001>
module attributes {stable_mosaic.version = 11 : i64} {
  func.func @_fused_attention_kernel(%arg0: i32, %arg1: i32, %arg2: memref<1x16x32xbf16, #tpu.memory_space<vmem>>, %arg3: memref<4x32x8xbf16, #tpu.memory_space<vmem>>, %arg4: memref<4x32x8xbf16, #tpu.memory_space<vmem>>, %arg5: memref<4x32x8xbf16, #tpu.memory_space<vmem>>, %arg6: memref<4x8x32xbf16, #tpu.memory_space<vmem>>, %arg7: memref<1x32xf32, #tpu.memory_space<vmem>>, %arg8: memref<1x16x32xf32, #tpu.memory_space<vmem>>, %arg9: memref<4x16x8xbf16, #tpu.memory_space<vmem>>, %arg10: memref<4x16x8xbf16, #tpu.memory_space<vmem>>) attributes {dimension_semantics = [#tpu.dimension_semantics<parallel>, #tpu.dimension_semantics<arbitrary>], iteration_bounds = array<i64: 2, 1>, scalar_prefetch = 0 : i64, scratch_operands = 2 : i64, tpu.core_type = #tpu.core_type<tc>, window_params = [{transform_indices = @transform_0, window_bounds = array<i64: 1, 16, 32>}, {pipeline_mode = #tpu.pipeline_mode<synchronous>, transform_indices = @transform_1, window_bounds = array<i64: 4, 32, 8>}, {pipeline_mode = #tpu.pipeline_mode<synchronous>, transform_indices = @transform_2, window_bounds = array<i64: 4, 32, 8>}, {pipeline_mode = #tpu.pipeline_mode<synchronous>, transform_indices = @transform_3, window_bounds = array<i64: 4, 32, 8>}, {pipeline_mode = #tpu.pipeline_mode<synchronous>, transform_indices = @transform_4, window_bounds = array<i64: 4, 8, 32>}, {pipeline_mode = #tpu.pipeline_mode<synchronous>, transform_indices = @transform_5, window_bounds = array<i64: 1, 32>}, {transform_indices = @transform_6, window_bounds = array<i64: 1, 16, 32>}]} {
    %c0_i32 = arith.constant 0 : i32
    %0 = arith.cmpi eq, %arg1, %c0_i32 : i32
    %1 = arith.extui %0 : i1 to i32
    %c0_i32_0 = arith.constant 0 : i32
    %2 = arith.cmpi ne, %1, %c0_i32_0 : i32
    scf.if %2 {
      %c0_91 = arith.constant 0 : index
      %c0_92 = arith.constant 0 : index
      %c0_93 = arith.constant 0 : index
      %171 = vector.load %arg2[%c0_91, %c0_92, %c0_93] : memref<1x16x32xbf16, #tpu.memory_space<vmem>>, vector<1x16x32xbf16>
      %172 = vector.shape_cast %171 : vector<1x16x32xbf16> to vector<16x32xbf16>
      %c0_94 = arith.constant 0 : index
      %c0_95 = arith.constant 0 : index
      %c0_96 = arith.constant 0 : index
      %173 = vector.load %arg4[%c0_94, %c0_95, %c0_96] : memref<4x32x8xbf16, #tpu.memory_space<vmem>>, vector<1x32x8xbf16>
      %174 = vector.shape_cast %173 : vector<1x32x8xbf16> to vector<32x8xbf16>
      %cst_97 = arith.constant dense<0.000000e+00> : vector<16x8xf32>
      %175 = tpu.matmul %172, %174, %cst_97 {dimension_numbers = #tpu.dot_dimension_numbers<[1], [0], [0], [1], [0, 0, 1, 1], [], []>} : vector<16x32xbf16>, vector<32x8xbf16>, vector<16x8xf32> -> vector<16x8xf32>
      %176 = arith.truncf %175 : vector<16x8xf32> to vector<16x8xbf16>
      %c0_98 = arith.constant 0 : index
      %c0_99 = arith.constant 0 : index
      %c0_100 = arith.constant 0 : index
      %177 = vector.load %arg9[%c0_98, %c0_99, %c0_100] : memref<4x16x8xbf16, #tpu.memory_space<vmem>>, vector<1x16x8xbf16>
      %178 = vector.shape_cast %177 : vector<1x16x8xbf16> to vector<16x8xbf16>
      %179 = vector.shape_cast %176 : vector<16x8xbf16> to vector<1x16x8xbf16>
      tpu.vector_store %arg9[%c0_98, %c0_99, %c0_100], %179 {strides = array<i32>} : memref<4x16x8xbf16, #tpu.memory_space<vmem>>, vector<1x16x8xbf16>,
      %c0_101 = arith.constant 0 : index
      %c0_102 = arith.constant 0 : index
      %c0_103 = arith.constant 0 : index
      %180 = vector.load %arg5[%c0_101, %c0_102, %c0_103] : memref<4x32x8xbf16, #tpu.memory_space<vmem>>, vector<1x32x8xbf16>
      %181 = vector.shape_cast %180 : vector<1x32x8xbf16> to vector<32x8xbf16>
      %cst_104 = arith.constant dense<0.000000e+00> : vector<16x8xf32>
      %182 = tpu.matmul %172, %181, %cst_104 {dimension_numbers = #tpu.dot_dimension_numbers<[1], [0], [0], [1], [0, 0, 1, 1], [], []>} : vector<16x32xbf16>, vector<32x8xbf16>, vector<16x8xf32> -> vector<16x8xf32>
      %183 = arith.truncf %182 : vector<16x8xf32> to vector<16x8xbf16>
      %c0_105 = arith.constant 0 : index
      %c0_106 = arith.constant 0 : index
      %c0_107 = arith.constant 0 : index
      %184 = vector.load %arg10[%c0_105, %c0_106, %c0_107] : memref<4x16x8xbf16, #tpu.memory_space<vmem>>, vector<1x16x8xbf16>
      %185 = vector.shape_cast %184 : vector<1x16x8xbf16> to vector<16x8xbf16>
      %186 = vector.shape_cast %183 : vector<16x8xbf16> to vector<1x16x8xbf16>
      tpu.vector_store %arg10[%c0_105, %c0_106, %c0_107], %186 {strides = array<i32>} : memref<4x16x8xbf16, #tpu.memory_space<vmem>>, vector<1x16x8xbf16>,
      %c1_108 = arith.constant 1 : index
      %c0_109 = arith.constant 0 : index
      %c0_110 = arith.constant 0 : index
      %187 = vector.load %arg4[%c1_108, %c0_109, %c0_110] : memref<4x32x8xbf16, #tpu.memory_space<vmem>>, vector<1x32x8xbf16>
      %188 = vector.shape_cast %187 : vector<1x32x8xbf16> to vector<32x8xbf16>
      %cst_111 = arith.constant dense<0.000000e+00> : vector<16x8xf32>
      %189 = tpu.matmul %172, %188, %cst_111 {dimension_numbers = #tpu.dot_dimension_numbers<[1], [0], [0], [1], [0, 0, 1, 1], [], []>} : vector<16x32xbf16>, vector<32x8xbf16>, vector<16x8xf32> -> vector<16x8xf32>
      %190 = arith.truncf %189 : vector<16x8xf32> to vector<16x8xbf16>
      %c1_112 = arith.constant 1 : index
      %c0_113 = arith.constant 0 : index
      %c0_114 = arith.constant 0 : index
      %191 = vector.load %arg9[%c1_112, %c0_113, %c0_114] : memref<4x16x8xbf16, #tpu.memory_space<vmem>>, vector<1x16x8xbf16>
      %192 = vector.shape_cast %191 : vector<1x16x8xbf16> to vector<16x8xbf16>
      %193 = vector.shape_cast %190 : vector<16x8xbf16> to vector<1x16x8xbf16>
      tpu.vector_store %arg9[%c1_112, %c0_113, %c0_114], %193 {strides = array<i32>} : memref<4x16x8xbf16, #tpu.memory_space<vmem>>, vector<1x16x8xbf16>,
      %c1_115 = arith.constant 1 : index
      %c0_116 = arith.constant 0 : index
      %c0_117 = arith.constant 0 : index
      %194 = vector.load %arg5[%c1_115, %c0_116, %c0_117] : memref<4x32x8xbf16, #tpu.memory_space<vmem>>, vector<1x32x8xbf16>
      %195 = vector.shape_cast %194 : vector<1x32x8xbf16> to vector<32x8xbf16>
      %cst_118 = arith.constant dense<0.000000e+00> : vector<16x8xf32>
      %196 = tpu.matmul %172, %195, %cst_118 {dimension_numbers = #tpu.dot_dimension_numbers<[1], [0], [0], [1], [0, 0, 1, 1], [], []>} : vector<16x32xbf16>, vector<32x8xbf16>, vector<16x8xf32> -> vector<16x8xf32>
      %197 = arith.truncf %196 : vector<16x8xf32> to vector<16x8xbf16>
      %c1_119 = arith.constant 1 : index
      %c0_120 = arith.constant 0 : index
      %c0_121 = arith.constant 0 : index
      %198 = vector.load %arg10[%c1_119, %c0_120, %c0_121] : memref<4x16x8xbf16, #tpu.memory_space<vmem>>, vector<1x16x8xbf16>
      %199 = vector.shape_cast %198 : vector<1x16x8xbf16> to vector<16x8xbf16>
      %200 = vector.shape_cast %197 : vector<16x8xbf16> to vector<1x16x8xbf16>
      tpu.vector_store %arg10[%c1_119, %c0_120, %c0_121], %200 {strides = array<i32>} : memref<4x16x8xbf16, #tpu.memory_space<vmem>>, vector<1x16x8xbf16>,
      %c2_122 = arith.constant 2 : index
      %c0_123 = arith.constant 0 : index
      %c0_124 = arith.constant 0 : index
      %201 = vector.load %arg4[%c2_122, %c0_123, %c0_124] : memref<4x32x8xbf16, #tpu.memory_space<vmem>>, vector<1x32x8xbf16>
      %202 = vector.shape_cast %201 : vector<1x32x8xbf16> to vector<32x8xbf16>
      %cst_125 = arith.constant dense<0.000000e+00> : vector<16x8xf32>
      %203 = tpu.matmul %172, %202, %cst_125 {dimension_numbers = #tpu.dot_dimension_numbers<[1], [0], [0], [1], [0, 0, 1, 1], [], []>} : vector<16x32xbf16>, vector<32x8xbf16>, vector<16x8xf32> -> vector<16x8xf32>
      %204 = arith.truncf %203 : vector<16x8xf32> to vector<16x8xbf16>
      %c2_126 = arith.constant 2 : index
      %c0_127 = arith.constant 0 : index
      %c0_128 = arith.constant 0 : index
      %205 = vector.load %arg9[%c2_126, %c0_127, %c0_128] : memref<4x16x8xbf16, #tpu.memory_space<vmem>>, vector<1x16x8xbf16>
      %206 = vector.shape_cast %205 : vector<1x16x8xbf16> to vector<16x8xbf16>
      %207 = vector.shape_cast %204 : vector<16x8xbf16> to vector<1x16x8xbf16>
      tpu.vector_store %arg9[%c2_126, %c0_127, %c0_128], %207 {strides = array<i32>} : memref<4x16x8xbf16, #tpu.memory_space<vmem>>, vector<1x16x8xbf16>,
      %c2_129 = arith.constant 2 : index
      %c0_130 = arith.constant 0 : index
      %c0_131 = arith.constant 0 : index
      %208 = vector.load %arg5[%c2_129, %c0_130, %c0_131] : memref<4x32x8xbf16, #tpu.memory_space<vmem>>, vector<1x32x8xbf16>
      %209 = vector.shape_cast %208 : vector<1x32x8xbf16> to vector<32x8xbf16>
      %cst_132 = arith.constant dense<0.000000e+00> : vector<16x8xf32>
      %210 = tpu.matmul %172, %209, %cst_132 {dimension_numbers = #tpu.dot_dimension_numbers<[1], [0], [0], [1], [0, 0, 1, 1], [], []>} : vector<16x32xbf16>, vector<32x8xbf16>, vector<16x8xf32> -> vector<16x8xf32>
      %211 = arith.truncf %210 : vector<16x8xf32> to vector<16x8xbf16>
      %c2_133 = arith.constant 2 : index
      %c0_134 = arith.constant 0 : index
      %c0_135 = arith.constant 0 : index
      %212 = vector.load %arg10[%c2_133, %c0_134, %c0_135] : memref<4x16x8xbf16, #tpu.memory_space<vmem>>, vector<1x16x8xbf16>
      %213 = vector.shape_cast %212 : vector<1x16x8xbf16> to vector<16x8xbf16>
      %214 = vector.shape_cast %211 : vector<16x8xbf16> to vector<1x16x8xbf16>
      tpu.vector_store %arg10[%c2_133, %c0_134, %c0_135], %214 {strides = array<i32>} : memref<4x16x8xbf16, #tpu.memory_space<vmem>>, vector<1x16x8xbf16>,
      %c3_136 = arith.constant 3 : index
      %c0_137 = arith.constant 0 : index
      %c0_138 = arith.constant 0 : index
      %215 = vector.load %arg4[%c3_136, %c0_137, %c0_138] : memref<4x32x8xbf16, #tpu.memory_space<vmem>>, vector<1x32x8xbf16>
      %216 = vector.shape_cast %215 : vector<1x32x8xbf16> to vector<32x8xbf16>
      %cst_139 = arith.constant dense<0.000000e+00> : vector<16x8xf32>
      %217 = tpu.matmul %172, %216, %cst_139 {dimension_numbers = #tpu.dot_dimension_numbers<[1], [0], [0], [1], [0, 0, 1, 1], [], []>} : vector<16x32xbf16>, vector<32x8xbf16>, vector<16x8xf32> -> vector<16x8xf32>
      %218 = arith.truncf %217 : vector<16x8xf32> to vector<16x8xbf16>
      %c3_140 = arith.constant 3 : index
      %c0_141 = arith.constant 0 : index
      %c0_142 = arith.constant 0 : index
      %219 = vector.load %arg9[%c3_140, %c0_141, %c0_142] : memref<4x16x8xbf16, #tpu.memory_space<vmem>>, vector<1x16x8xbf16>
      %220 = vector.shape_cast %219 : vector<1x16x8xbf16> to vector<16x8xbf16>
      %221 = vector.shape_cast %218 : vector<16x8xbf16> to vector<1x16x8xbf16>
      tpu.vector_store %arg9[%c3_140, %c0_141, %c0_142], %221 {strides = array<i32>} : memref<4x16x8xbf16, #tpu.memory_space<vmem>>, vector<1x16x8xbf16>,
      %c3_143 = arith.constant 3 : index
      %c0_144 = arith.constant 0 : index
      %c0_145 = arith.constant 0 : index
      %222 = vector.load %arg5[%c3_143, %c0_144, %c0_145] : memref<4x32x8xbf16, #tpu.memory_space<vmem>>, vector<1x32x8xbf16>
      %223 = vector.shape_cast %222 : vector<1x32x8xbf16> to vector<32x8xbf16>
      %cst_146 = arith.constant dense<0.000000e+00> : vector<16x8xf32>
      %224 = tpu.matmul %172, %223, %cst_146 {dimension_numbers = #tpu.dot_dimension_numbers<[1], [0], [0], [1], [0, 0, 1, 1], [], []>} : vector<16x32xbf16>, vector<32x8xbf16>, vector<16x8xf32> -> vector<16x8xf32>
      %225 = arith.truncf %224 : vector<16x8xf32> to vector<16x8xbf16>
      %c3_147 = arith.constant 3 : index
      %c0_148 = arith.constant 0 : index
      %c0_149 = arith.constant 0 : index
      %226 = vector.load %arg10[%c3_147, %c0_148, %c0_149] : memref<4x16x8xbf16, #tpu.memory_space<vmem>>, vector<1x16x8xbf16>
      %227 = vector.shape_cast %226 : vector<1x16x8xbf16> to vector<16x8xbf16>
      %228 = vector.shape_cast %225 : vector<16x8xbf16> to vector<1x16x8xbf16>
      tpu.vector_store %arg10[%c3_147, %c0_148, %c0_149], %228 {strides = array<i32>} : memref<4x16x8xbf16, #tpu.memory_space<vmem>>, vector<1x16x8xbf16>,
    } else {
    }
    %c16_i32 = arith.constant 16 : i32
    %3 = arith.muli %arg1, %c16_i32 : i32
    %4 = tpu.assume_multiple %3, 16 : i32
    %c0 = arith.constant 0 : index
    %5 = arith.index_cast %4 : i32 to index
    %c0_1 = arith.constant 0 : index
    %6 = vector.load %arg2[%c0, %5, %c0_1] : memref<1x16x32xbf16, #tpu.memory_space<vmem>>, vector<1x16x32xbf16>
    %7 = vector.shape_cast %6 : vector<1x16x32xbf16> to vector<16x32xbf16>
    %cst = arith.constant 0.000000e+00 : f32
    %8 = vector.broadcast %cst : f32 to vector<16x32xf32>
    %c0_2 = arith.constant 0 : index
    %c0_3 = arith.constant 0 : index
    %c0_4 = arith.constant 0 : index
    %9 = vector.load %arg3[%c0_2, %c0_3, %c0_4] : memref<4x32x8xbf16, #tpu.memory_space<vmem>>, vector<1x32x8xbf16>
    %10 = vector.shape_cast %9 : vector<1x32x8xbf16> to vector<32x8xbf16>
    %cst_5 = arith.constant dense<0.000000e+00> : vector<16x8xf32>
    %11 = tpu.matmul %7, %10, %cst_5 {dimension_numbers = #tpu.dot_dimension_numbers<[1], [0], [0], [1], [0, 0, 1, 1], [], []>} : vector<16x32xbf16>, vector<32x8xbf16>, vector<16x8xf32> -> vector<16x8xf32>
    %cst_6 = arith.constant 0.353553385 : f32
    %12 = vector.broadcast %cst_6 : f32 to vector<16x8xf32>
    %13 = arith.mulf %11, %12 : vector<16x8xf32>
    %14 = arith.truncf %13 : vector<16x8xf32> to vector<16x8xbf16>
    %c0_7 = arith.constant 0 : index
    %c0_8 = arith.constant 0 : index
    %c0_9 = arith.constant 0 : index
    %15 = vector.load %arg9[%c0_7, %c0_8, %c0_9] : memref<4x16x8xbf16, #tpu.memory_space<vmem>>, vector<1x16x8xbf16>
    %16 = vector.shape_cast %15 : vector<1x16x8xbf16> to vector<16x8xbf16>
    %c0_10 = arith.constant 0 : index
    %c0_11 = arith.constant 0 : index
    %c0_12 = arith.constant 0 : index
    %17 = vector.load %arg10[%c0_10, %c0_11, %c0_12] : memref<4x16x8xbf16, #tpu.memory_space<vmem>>, vector<1x16x8xbf16>
    %18 = vector.shape_cast %17 : vector<1x16x8xbf16> to vector<16x8xbf16>
    %cst_13 = arith.constant dense<0.000000e+00> : vector<16x16xf32>
    %19 = tpu.matmul %14, %16, %cst_13 {dimension_numbers = #tpu.dot_dimension_numbers<[1], [1], [0], [0], [0, 0, 1, 0], [], []>} : vector<16x8xbf16>, vector<16x8xbf16>, vector<16x16xf32> -> vector<16x16xf32>
    %20 = tpu.iota {dimensions = array<i32: 0>} : vector<16x16xi32>
    %21 = vector.broadcast %4 : i32 to vector<16x16xi32>
    %22 = arith.addi %21, %20 : vector<16x16xi32>
    %23 = tpu.iota {dimensions = array<i32: 1>} : vector<16x16xi32>
    %c0_i32_14 = arith.constant 0 : i32
    %24 = vector.broadcast %c0_i32_14 : i32 to vector<16x16xi32>
    %25 = arith.addi %24, %23 : vector<16x16xi32>
    %26 = arith.subi %22, %25 : vector<16x16xi32>
    %27 = math.absi %26 : vector<16x16xi32>
    %c2_i32 = arith.constant 2 : i32
    %28 = vector.broadcast %c2_i32 : i32 to vector<16x16xi32>
    %29 = arith.cmpi sle, %27, %28 : vector<16x16xi32>
    %cst_15 = arith.constant -1.000000e+30 : f32
    %30 = vector.broadcast %cst_15 : f32 to vector<16x16xf32>
    %31 = arith.select %29, %19, %30 : vector<16x16xi1>, vector<16x16xf32>
    %cst_16 = arith.constant dense<0xFF800000> : vector<16xf32>
    %32 = vector.multi_reduction <maximumf>, %31, %cst_16 [1] : vector<16x16xf32> to vector<16xf32>
    %33 = vector.shape_cast %32 : vector<16xf32> to vector<16x1xf32>
    %34 = vector.broadcast %33 : vector<16x1xf32> to vector<16x16xf32>
    %35 = arith.subf %31, %34 : vector<16x16xf32>
    %36 = math.exp %35 : vector<16x16xf32>
    %cst_17 = arith.constant dense<0.000000e+00> : vector<16xf32>
    %37 = vector.multi_reduction <add>, %36, %cst_17 [1] : vector<16x16xf32> to vector<16xf32>
    %38 = vector.shape_cast %37 : vector<16xf32> to vector<16x1xf32>
    %39 = arith.truncf %36 : vector<16x16xf32> to vector<16x16xbf16>
    %cst_18 = arith.constant dense<0.000000e+00> : vector<16x8xf32>
    %40 = tpu.matmul %39, %18, %cst_18 {dimension_numbers = #tpu.dot_dimension_numbers<[1], [0], [0], [1], [0, 0, 1, 1], [], []>} : vector<16x16xbf16>, vector<16x8xbf16>, vector<16x8xf32> -> vector<16x8xf32>
    %41 = vector.broadcast %38 : vector<16x1xf32> to vector<16x8xf32>
    %42 = arith.divf %40, %41 : vector<16x8xf32>
    %43 = arith.truncf %42 : vector<16x8xf32> to vector<16x8xbf16>
    %c0_19 = arith.constant 0 : index
    %c0_20 = arith.constant 0 : index
    %c0_21 = arith.constant 0 : index
    %44 = vector.load %arg6[%c0_19, %c0_20, %c0_21] : memref<4x8x32xbf16, #tpu.memory_space<vmem>>, vector<1x8x32xbf16>
    %45 = vector.shape_cast %44 : vector<1x8x32xbf16> to vector<8x32xbf16>
    %cst_22 = arith.constant dense<0.000000e+00> : vector<16x32xf32>
    %46 = tpu.matmul %43, %45, %cst_22 {dimension_numbers = #tpu.dot_dimension_numbers<[1], [0], [0], [1], [0, 0, 1, 1], [], []>} : vector<16x8xbf16>, vector<8x32xbf16>, vector<16x32xf32> -> vector<16x32xf32>
    %47 = arith.addf %8, %46 : vector<16x32xf32>
    %c1 = arith.constant 1 : index
    %c0_23 = arith.constant 0 : index
    %c0_24 = arith.constant 0 : index
    %48 = vector.load %arg3[%c1, %c0_23, %c0_24] : memref<4x32x8xbf16, #tpu.memory_space<vmem>>, vector<1x32x8xbf16>
    %49 = vector.shape_cast %48 : vector<1x32x8xbf16> to vector<32x8xbf16>
    %cst_25 = arith.constant dense<0.000000e+00> : vector<16x8xf32>
    %50 = tpu.matmul %7, %49, %cst_25 {dimension_numbers = #tpu.dot_dimension_numbers<[1], [0], [0], [1], [0, 0, 1, 1], [], []>} : vector<16x32xbf16>, vector<32x8xbf16>, vector<16x8xf32> -> vector<16x8xf32>
    %cst_26 = arith.constant 0.353553385 : f32
    %51 = vector.broadcast %cst_26 : f32 to vector<16x8xf32>
    %52 = arith.mulf %50, %51 : vector<16x8xf32>
    %53 = arith.truncf %52 : vector<16x8xf32> to vector<16x8xbf16>
    %c1_27 = arith.constant 1 : index
    %c0_28 = arith.constant 0 : index
    %c0_29 = arith.constant 0 : index
    %54 = vector.load %arg9[%c1_27, %c0_28, %c0_29] : memref<4x16x8xbf16, #tpu.memory_space<vmem>>, vector<1x16x8xbf16>
    %55 = vector.shape_cast %54 : vector<1x16x8xbf16> to vector<16x8xbf16>
    %c1_30 = arith.constant 1 : index
    %c0_31 = arith.constant 0 : index
    %c0_32 = arith.constant 0 : index
    %56 = vector.load %arg10[%c1_30, %c0_31, %c0_32] : memref<4x16x8xbf16, #tpu.memory_space<vmem>>, vector<1x16x8xbf16>
    %57 = vector.shape_cast %56 : vector<1x16x8xbf16> to vector<16x8xbf16>
    %cst_33 = arith.constant dense<0.000000e+00> : vector<16x16xf32>
    %58 = tpu.matmul %53, %55, %cst_33 {dimension_numbers = #tpu.dot_dimension_numbers<[1], [1], [0], [0], [0, 0, 1, 0], [], []>} : vector<16x8xbf16>, vector<16x8xbf16>, vector<16x16xf32> -> vector<16x16xf32>
    %59 = tpu.iota {dimensions = array<i32: 0>} : vector<16x16xi32>
    %60 = vector.broadcast %4 : i32 to vector<16x16xi32>
    %61 = arith.addi %60, %59 : vector<16x16xi32>
    %62 = tpu.iota {dimensions = array<i32: 1>} : vector<16x16xi32>
    %c0_i32_34 = arith.constant 0 : i32
    %63 = vector.broadcast %c0_i32_34 : i32 to vector<16x16xi32>
    %64 = arith.addi %63, %62 : vector<16x16xi32>
    %65 = arith.subi %61, %64 : vector<16x16xi32>
    %66 = math.absi %65 : vector<16x16xi32>
    %c2_i32_35 = arith.constant 2 : i32
    %67 = vector.broadcast %c2_i32_35 : i32 to vector<16x16xi32>
    %68 = arith.cmpi sle, %66, %67 : vector<16x16xi32>
    %cst_36 = arith.constant -1.000000e+30 : f32
    %69 = vector.broadcast %cst_36 : f32 to vector<16x16xf32>
    %70 = arith.select %68, %58, %69 : vector<16x16xi1>, vector<16x16xf32>
    %cst_37 = arith.constant dense<0xFF800000> : vector<16xf32>
    %71 = vector.multi_reduction <maximumf>, %70, %cst_37 [1] : vector<16x16xf32> to vector<16xf32>
    %72 = vector.shape_cast %71 : vector<16xf32> to vector<16x1xf32>
    %73 = vector.broadcast %72 : vector<16x1xf32> to vector<16x16xf32>
    %74 = arith.subf %70, %73 : vector<16x16xf32>
    %75 = math.exp %74 : vector<16x16xf32>
    %cst_38 = arith.constant dense<0.000000e+00> : vector<16xf32>
    %76 = vector.multi_reduction <add>, %75, %cst_38 [1] : vector<16x16xf32> to vector<16xf32>
    %77 = vector.shape_cast %76 : vector<16xf32> to vector<16x1xf32>
    %78 = arith.truncf %75 : vector<16x16xf32> to vector<16x16xbf16>
    %cst_39 = arith.constant dense<0.000000e+00> : vector<16x8xf32>
    %79 = tpu.matmul %78, %57, %cst_39 {dimension_numbers = #tpu.dot_dimension_numbers<[1], [0], [0], [1], [0, 0, 1, 1], [], []>} : vector<16x16xbf16>, vector<16x8xbf16>, vector<16x8xf32> -> vector<16x8xf32>
    %80 = vector.broadcast %77 : vector<16x1xf32> to vector<16x8xf32>
    %81 = arith.divf %79, %80 : vector<16x8xf32>
    %82 = arith.truncf %81 : vector<16x8xf32> to vector<16x8xbf16>
    %c1_40 = arith.constant 1 : index
    %c0_41 = arith.constant 0 : index
    %c0_42 = arith.constant 0 : index
    %83 = vector.load %arg6[%c1_40, %c0_41, %c0_42] : memref<4x8x32xbf16, #tpu.memory_space<vmem>>, vector<1x8x32xbf16>
    %84 = vector.shape_cast %83 : vector<1x8x32xbf16> to vector<8x32xbf16>
    %cst_43 = arith.constant dense<0.000000e+00> : vector<16x32xf32>
    %85 = tpu.matmul %82, %84, %cst_43 {dimension_numbers = #tpu.dot_dimension_numbers<[1], [0], [0], [1], [0, 0, 1, 1], [], []>} : vector<16x8xbf16>, vector<8x32xbf16>, vector<16x32xf32> -> vector<16x32xf32>
    %86 = arith.addf %47, %85 : vector<16x32xf32>
    %c2 = arith.constant 2 : index
    %c0_44 = arith.constant 0 : index
    %c0_45 = arith.constant 0 : index
    %87 = vector.load %arg3[%c2, %c0_44, %c0_45] : memref<4x32x8xbf16, #tpu.memory_space<vmem>>, vector<1x32x8xbf16>
    %88 = vector.shape_cast %87 : vector<1x32x8xbf16> to vector<32x8xbf16>
    %cst_46 = arith.constant dense<0.000000e+00> : vector<16x8xf32>
    %89 = tpu.matmul %7, %88, %cst_46 {dimension_numbers = #tpu.dot_dimension_numbers<[1], [0], [0], [1], [0, 0, 1, 1], [], []>} : vector<16x32xbf16>, vector<32x8xbf16>, vector<16x8xf32> -> vector<16x8xf32>
    %cst_47 = arith.constant 0.353553385 : f32
    %90 = vector.broadcast %cst_47 : f32 to vector<16x8xf32>
    %91 = arith.mulf %89, %90 : vector<16x8xf32>
    %92 = arith.truncf %91 : vector<16x8xf32> to vector<16x8xbf16>
    %c2_48 = arith.constant 2 : index
    %c0_49 = arith.constant 0 : index
    %c0_50 = arith.constant 0 : index
    %93 = vector.load %arg9[%c2_48, %c0_49, %c0_50] : memref<4x16x8xbf16, #tpu.memory_space<vmem>>, vector<1x16x8xbf16>
    %94 = vector.shape_cast %93 : vector<1x16x8xbf16> to vector<16x8xbf16>
    %c2_51 = arith.constant 2 : index
    %c0_52 = arith.constant 0 : index
    %c0_53 = arith.constant 0 : index
    %95 = vector.load %arg10[%c2_51, %c0_52, %c0_53] : memref<4x16x8xbf16, #tpu.memory_space<vmem>>, vector<1x16x8xbf16>
    %96 = vector.shape_cast %95 : vector<1x16x8xbf16> to vector<16x8xbf16>
    %cst_54 = arith.constant dense<0.000000e+00> : vector<16x16xf32>
    %97 = tpu.matmul %92, %94, %cst_54 {dimension_numbers = #tpu.dot_dimension_numbers<[1], [1], [0], [0], [0, 0, 1, 0], [], []>} : vector<16x8xbf16>, vector<16x8xbf16>, vector<16x16xf32> -> vector<16x16xf32>
    %98 = tpu.iota {dimensions = array<i32: 0>} : vector<16x16xi32>
    %99 = vector.broadcast %4 : i32 to vector<16x16xi32>
    %100 = arith.addi %99, %98 : vector<16x16xi32>
    %101 = tpu.iota {dimensions = array<i32: 1>} : vector<16x16xi32>
    %c0_i32_55 = arith.constant 0 : i32
    %102 = vector.broadcast %c0_i32_55 : i32 to vector<16x16xi32>
    %103 = arith.addi %102, %101 : vector<16x16xi32>
    %104 = arith.subi %100, %103 : vector<16x16xi32>
    %105 = math.absi %104 : vector<16x16xi32>
    %c2_i32_56 = arith.constant 2 : i32
    %106 = vector.broadcast %c2_i32_56 : i32 to vector<16x16xi32>
    %107 = arith.cmpi sle, %105, %106 : vector<16x16xi32>
    %cst_57 = arith.constant -1.000000e+30 : f32
    %108 = vector.broadcast %cst_57 : f32 to vector<16x16xf32>
    %109 = arith.select %107, %97, %108 : vector<16x16xi1>, vector<16x16xf32>
    %cst_58 = arith.constant dense<0xFF800000> : vector<16xf32>
    %110 = vector.multi_reduction <maximumf>, %109, %cst_58 [1] : vector<16x16xf32> to vector<16xf32>
    %111 = vector.shape_cast %110 : vector<16xf32> to vector<16x1xf32>
    %112 = vector.broadcast %111 : vector<16x1xf32> to vector<16x16xf32>
    %113 = arith.subf %109, %112 : vector<16x16xf32>
    %114 = math.exp %113 : vector<16x16xf32>
    %cst_59 = arith.constant dense<0.000000e+00> : vector<16xf32>
    %115 = vector.multi_reduction <add>, %114, %cst_59 [1] : vector<16x16xf32> to vector<16xf32>
    %116 = vector.shape_cast %115 : vector<16xf32> to vector<16x1xf32>
    %117 = arith.truncf %114 : vector<16x16xf32> to vector<16x16xbf16>
    %cst_60 = arith.constant dense<0.000000e+00> : vector<16x8xf32>
    %118 = tpu.matmul %117, %96, %cst_60 {dimension_numbers = #tpu.dot_dimension_numbers<[1], [0], [0], [1], [0, 0, 1, 1], [], []>} : vector<16x16xbf16>, vector<16x8xbf16>, vector<16x8xf32> -> vector<16x8xf32>
    %119 = vector.broadcast %116 : vector<16x1xf32> to vector<16x8xf32>
    %120 = arith.divf %118, %119 : vector<16x8xf32>
    %121 = arith.truncf %120 : vector<16x8xf32> to vector<16x8xbf16>
    %c2_61 = arith.constant 2 : index
    %c0_62 = arith.constant 0 : index
    %c0_63 = arith.constant 0 : index
    %122 = vector.load %arg6[%c2_61, %c0_62, %c0_63] : memref<4x8x32xbf16, #tpu.memory_space<vmem>>, vector<1x8x32xbf16>
    %123 = vector.shape_cast %122 : vector<1x8x32xbf16> to vector<8x32xbf16>
    %cst_64 = arith.constant dense<0.000000e+00> : vector<16x32xf32>
    %124 = tpu.matmul %121, %123, %cst_64 {dimension_numbers = #tpu.dot_dimension_numbers<[1], [0], [0], [1], [0, 0, 1, 1], [], []>} : vector<16x8xbf16>, vector<8x32xbf16>, vector<16x32xf32> -> vector<16x32xf32>
    %125 = arith.addf %86, %124 : vector<16x32xf32>
    %c3 = arith.constant 3 : index
    %c0_65 = arith.constant 0 : index
    %c0_66 = arith.constant 0 : index
    %126 = vector.load %arg3[%c3, %c0_65, %c0_66] : memref<4x32x8xbf16, #tpu.memory_space<vmem>>, vector<1x32x8xbf16>
    %127 = vector.shape_cast %126 : vector<1x32x8xbf16> to vector<32x8xbf16>
    %cst_67 = arith.constant dense<0.000000e+00> : vector<16x8xf32>
    %128 = tpu.matmul %7, %127, %cst_67 {dimension_numbers = #tpu.dot_dimension_numbers<[1], [0], [0], [1], [0, 0, 1, 1], [], []>} : vector<16x32xbf16>, vector<32x8xbf16>, vector<16x8xf32> -> vector<16x8xf32>
    %cst_68 = arith.constant 0.353553385 : f32
    %129 = vector.broadcast %cst_68 : f32 to vector<16x8xf32>
    %130 = arith.mulf %128, %129 : vector<16x8xf32>
    %131 = arith.truncf %130 : vector<16x8xf32> to vector<16x8xbf16>
    %c3_69 = arith.constant 3 : index
    %c0_70 = arith.constant 0 : index
    %c0_71 = arith.constant 0 : index
    %132 = vector.load %arg9[%c3_69, %c0_70, %c0_71] : memref<4x16x8xbf16, #tpu.memory_space<vmem>>, vector<1x16x8xbf16>
    %133 = vector.shape_cast %132 : vector<1x16x8xbf16> to vector<16x8xbf16>
    %c3_72 = arith.constant 3 : index
    %c0_73 = arith.constant 0 : index
    %c0_74 = arith.constant 0 : index
    %134 = vector.load %arg10[%c3_72, %c0_73, %c0_74] : memref<4x16x8xbf16, #tpu.memory_space<vmem>>, vector<1x16x8xbf16>
    %135 = vector.shape_cast %134 : vector<1x16x8xbf16> to vector<16x8xbf16>
    %cst_75 = arith.constant dense<0.000000e+00> : vector<16x16xf32>
    %136 = tpu.matmul %131, %133, %cst_75 {dimension_numbers = #tpu.dot_dimension_numbers<[1], [1], [0], [0], [0, 0, 1, 0], [], []>} : vector<16x8xbf16>, vector<16x8xbf16>, vector<16x16xf32> -> vector<16x16xf32>
    %137 = tpu.iota {dimensions = array<i32: 0>} : vector<16x16xi32>
    %138 = vector.broadcast %4 : i32 to vector<16x16xi32>
    %139 = arith.addi %138, %137 : vector<16x16xi32>
    %140 = tpu.iota {dimensions = array<i32: 1>} : vector<16x16xi32>
    %c0_i32_76 = arith.constant 0 : i32
    %141 = vector.broadcast %c0_i32_76 : i32 to vector<16x16xi32>
    %142 = arith.addi %141, %140 : vector<16x16xi32>
    %143 = arith.subi %139, %142 : vector<16x16xi32>
    %144 = math.absi %143 : vector<16x16xi32>
    %c2_i32_77 = arith.constant 2 : i32
    %145 = vector.broadcast %c2_i32_77 : i32 to vector<16x16xi32>
    %146 = arith.cmpi sle, %144, %145 : vector<16x16xi32>
    %cst_78 = arith.constant -1.000000e+30 : f32
    %147 = vector.broadcast %cst_78 : f32 to vector<16x16xf32>
    %148 = arith.select %146, %136, %147 : vector<16x16xi1>, vector<16x16xf32>
    %cst_79 = arith.constant dense<0xFF800000> : vector<16xf32>
    %149 = vector.multi_reduction <maximumf>, %148, %cst_79 [1] : vector<16x16xf32> to vector<16xf32>
    %150 = vector.shape_cast %149 : vector<16xf32> to vector<16x1xf32>
    %151 = vector.broadcast %150 : vector<16x1xf32> to vector<16x16xf32>
    %152 = arith.subf %148, %151 : vector<16x16xf32>
    %153 = math.exp %152 : vector<16x16xf32>
    %cst_80 = arith.constant dense<0.000000e+00> : vector<16xf32>
    %154 = vector.multi_reduction <add>, %153, %cst_80 [1] : vector<16x16xf32> to vector<16xf32>
    %155 = vector.shape_cast %154 : vector<16xf32> to vector<16x1xf32>
    %156 = arith.truncf %153 : vector<16x16xf32> to vector<16x16xbf16>
    %cst_81 = arith.constant dense<0.000000e+00> : vector<16x8xf32>
    %157 = tpu.matmul %156, %135, %cst_81 {dimension_numbers = #tpu.dot_dimension_numbers<[1], [0], [0], [1], [0, 0, 1, 1], [], []>} : vector<16x16xbf16>, vector<16x8xbf16>, vector<16x8xf32> -> vector<16x8xf32>
    %158 = vector.broadcast %155 : vector<16x1xf32> to vector<16x8xf32>
    %159 = arith.divf %157, %158 : vector<16x8xf32>
    %160 = arith.truncf %159 : vector<16x8xf32> to vector<16x8xbf16>
    %c3_82 = arith.constant 3 : index
    %c0_83 = arith.constant 0 : index
    %c0_84 = arith.constant 0 : index
    %161 = vector.load %arg6[%c3_82, %c0_83, %c0_84] : memref<4x8x32xbf16, #tpu.memory_space<vmem>>, vector<1x8x32xbf16>
    %162 = vector.shape_cast %161 : vector<1x8x32xbf16> to vector<8x32xbf16>
    %cst_85 = arith.constant dense<0.000000e+00> : vector<16x32xf32>
    %163 = tpu.matmul %160, %162, %cst_85 {dimension_numbers = #tpu.dot_dimension_numbers<[1], [0], [0], [1], [0, 0, 1, 1], [], []>} : vector<16x8xbf16>, vector<8x32xbf16>, vector<16x32xf32> -> vector<16x32xf32>
    %164 = arith.addf %125, %163 : vector<16x32xf32>
    %c0_86 = arith.constant 0 : index
    %c0_87 = arith.constant 0 : index
    %165 = vector.load %arg7[%c0_86, %c0_87] : memref<1x32xf32, #tpu.memory_space<vmem>>, vector<1x32xf32>
    %166 = vector.broadcast %165 : vector<1x32xf32> to vector<16x32xf32>
    %167 = arith.addf %164, %166 : vector<16x32xf32>
    %c0_88 = arith.constant 0 : index
    %c0_89 = arith.constant 0 : index
    %c0_90 = arith.constant 0 : index
    %168 = vector.load %arg8[%c0_88, %c0_89, %c0_90] : memref<1x16x32xf32, #tpu.memory_space<vmem>>, vector<1x16x32xf32>
    %169 = vector.shape_cast %168 : vector<1x16x32xf32> to vector<16x32xf32>
    %170 = vector.shape_cast %167 : vector<16x32xf32> to vector<1x16x32xf32>
    tpu.vector_store %arg8[%c0_88, %c0_89, %c0_90], %170 {strides = array<i32>} : memref<1x16x32xf32, #tpu.memory_space<vmem>>, vector<1x16x32xf32>,
    return
  }
  func.func @transform_0(%arg0: i32, %arg1: i32) -> (i32, i32, i32) {
    %c0_i32 = arith.constant 0 : i32
    %c0_i32_0 = arith.constant 0 : i32
    %c0_i32_1 = arith.constant 0 : i32
    return %arg0, %c0_i32, %c0_i32_0 : i32, i32, i32
  }
  func.func @transform_1(%arg0: i32, %arg1: i32) -> (i32, i32, i32) {
    %c0_i32 = arith.constant 0 : i32
    %c0_i32_0 = arith.constant 0 : i32
    %c0_i32_1 = arith.constant 0 : i32
    %c0_i32_2 = arith.constant 0 : i32
    return %c0_i32, %c0_i32_0, %c0_i32_1 : i32, i32, i32
  }
  func.func @transform_2(%arg0: i32, %arg1: i32) -> (i32, i32, i32) {
    %c0_i32 = arith.constant 0 : i32
    %c0_i32_0 = arith.constant 0 : i32
    %c0_i32_1 = arith.constant 0 : i32
    %c0_i32_2 = arith.constant 0 : i32
    return %c0_i32, %c0_i32_0, %c0_i32_1 : i32, i32, i32
  }
  func.func @transform_3(%arg0: i32, %arg1: i32) -> (i32, i32, i32) {
    %c0_i32 = arith.constant 0 : i32
    %c0_i32_0 = arith.constant 0 : i32
    %c0_i32_1 = arith.constant 0 : i32
    %c0_i32_2 = arith.constant 0 : i32
    return %c0_i32, %c0_i32_0, %c0_i32_1 : i32, i32, i32
  }
  func.func @transform_4(%arg0: i32, %arg1: i32) -> (i32, i32, i32) {
    %c0_i32 = arith.constant 0 : i32
    %c0_i32_0 = arith.constant 0 : i32
    %c0_i32_1 = arith.constant 0 : i32
    %c0_i32_2 = arith.constant 0 : i32
    return %c0_i32, %c0_i32_0, %c0_i32_1 : i32, i32, i32
  }
  func.func @transform_5(%arg0: i32, %arg1: i32) -> (i32, i32) {
    %c0_i32 = arith.constant 0 : i32
    %c0_i32_0 = arith.constant 0 : i32
    %c0_i32_1 = arith.constant 0 : i32
    return %c0_i32, %c0_i32_0 : i32, i32
  }
  func.func @transform_6(%arg0: i32, %arg1: i32) -> (i32, i32, i32) {
    %c0_i32 = arith.constant 0 : i32
    %c0_i32_0 = arith.constant 0 : i32
    return %arg0, %arg1, %c0_i32 : i32, i32, i32
  }
}

</mosaic_0001>

<llo_original>
// kernel: tpu_custom_call.1
$region0: #{tpu_custom_call.1}
  #allocation0 [shape = 'u32[]', space=smem, size = 0x4, offset = 0x4, fixed_abs, tag = 'smem constant byte address 0x4 - core index']
  #allocation1 [shape = 'u32[144,128]{1,0:T(1,128)}', space=vmem, size = 0x12000, scoped, tag = 'internal scratch']
  #allocation2 [shape = 'bf16[4,16,8]{2,1,0:T(16,128)(2,1)}', space=vmem, size = 0x4000, scoped, tag = 'scratch operand']
  #allocation3 [shape = 'bf16[4,16,8]{2,1,0:T(16,128)(2,1)}', space=vmem, size = 0x4000, scoped, tag = 'scratch operand']
  %s0 = inlined_call_operand.vmem [shape: bf16[2,16,32], index: 0, kind: input, shape index: {}]
  %s1 = inlined_call_operand.vmem [shape: bf16[4,32,8], index: 1, kind: input, shape index: {}]
  %s2 = inlined_call_operand.vmem [shape: bf16[4,32,8], index: 2, kind: input, shape index: {}]
  %s3 = inlined_call_operand.vmem [shape: bf16[4,32,8], index: 3, kind: input, shape index: {}]
  %s4 = inlined_call_operand.vmem [shape: bf16[4,8,32], index: 4, kind: input, shape index: {}]
  %s5 = inlined_call_operand.vmem [shape: f32[1,32], index: 5, kind: input, shape index: {}]
  %s6 = inlined_call_operand.hbm [shape: f32[2,16,32], index: 6, kind: output, shape index: {}]
  %s7 = sld [smem:[#allocation0]]
  $region61: #{tpu_custom_call.1} parent=0
    _
  %s9 = ssub.s32 1, %s7
  %s10 = scalar_select 0, %s9, %s7
  $region1: #{tpu_custom_call.1} parent=0
    #allocation4 [shape = 'u8[16384]{0}', space=vmem, size = 0x4000, scoped, tag = 'output window, operand 0']
    #allocation5 [shape = 's32[2]{0}', space=sflag, size = 0x8, scoped, tag = 'scoped memory for tpu_custom_call.1']
    %11 = vsyncpa [#allocation5], 0
    %s12 = scalar_lea.sflag [#allocation5], 1
    %13 = vsyncpa %s12, 0
    loop: start=0, step=1, limit=4
    $region2: #{tpu_custom_call.1} parent=1 // loop_pre_header
      _
    $region3: #{tpu_custom_call.1} parent=1 // loop_header
      %s15 = sphi 0, %s19
      %p16 = scmp.ge.s32.totalorder %s15, 4
      %s22 = sphi 0, %s34
      %s23 = sphi 0, %s30
      %s24 = sphi 0, %s22
      %s25 = sphi 0, %s23
      %s26 = sphi 0, %s24
      %s27 = sphi 0, %s25
      %s37 = sphi 0, %s39
      %s40 = sphi 0, %s37
      %s41 = sphi 0, %s40
      %s57 = sphi 0, %s41
      %s61 = sphi 0, %s61
      %s63 = sphi 0, %s61
      %s64 = sphi 0, %s63
      %s78 = sphi 0, %s64
      %s82 = sphi 0, %s82
      %s84 = sphi 0, %s82
      %s85 = sphi 0, %s84
      %s99 = sphi 0, %s85
      %s103 = sphi 0, %s103
      %s105 = sphi 0, %s103
      %s106 = sphi 0, %s105
      %s120 = sphi 0, %s106
      %s124 = sphi 0, %s124
      %s126 = sphi 0, %s124
      %s127 = sphi 0, %s126
      %s141 = sphi 0, %s127
      %s145 = sphi 0, %s145
      %s147 = sphi 0, %s145
      %s148 = sphi 0, %s147
      %s162 = sphi 0, %s148
      %s170 = sphi 0, %s172
      %s173 = sphi 0, %s170
      %s174 = sphi 0, %s173
      %s190 = sphi 0, %s174
    $region4: #{tpu_custom_call.1} parent=1 // loop_header_branch
      %18 = sbr.rel (%p16) target = $region8
    $region5: #{tpu_custom_call.1} parent=1 // loop_body
      %s20 = ssub.s32 %s15, 1
      %s21 = ssub.s32 %s15, 2
      %s28 = sadd.s32 1, %s23
      %p29 = scmp.ge.s32.totalorder %s28, 1
      %s30 = scalar_select %p29, 0, %s28
      %s31 = sadd.s32 1, %s22
      %s32 = scalar_select %p29, %s31, %s22
      %p33 = scmp.ge.s32.totalorder %s32, 2
      %s34 = scalar_select %p33, 0, %s32
      %s35 = ssub.s32 %s22, %s34
      %p36 = scmp.eq.s32.totalorder %s35, 0
      %s38 = sadd.s32 %s37, 1
      %s39 = scalar_select %p36, %s37, %s38
      %p42 = pneg %p36
      %p43 = scmp.eq.s32.totalorder %s15, 1
      %p44 = por %p42, %p43
      %p45 = scmp.ne.s32.totalorder %s37, %s40
      %p46 = scmp.eq.s32.totalorder %s15, 0
      %p47 = por %p45, %p46
      %p48 = scmp.ne.s32.totalorder %s37, %s40
      %p49 = scmp.eq.s32.totalorder %s20, 1
      %p50 = por %p48, %p49
      %p51 = scmp.ne.s32.totalorder %s40, %s41
      %p52 = scmp.eq.s32.totalorder %s20, 0
      %p53 = por %p51, %p52
      %p54 = scmp.ne.s32.totalorder %s40, %s41
      %p55 = scmp.eq.s32.totalorder %s21, 1
      %p56 = por %p54, %p55
      %p58 = scmp.ne.s32.totalorder %s41, %s57
      %p59 = scmp.eq.s32.totalorder %s21, 0
      %p60 = por %p58, %p59
      %s62 = sadd.s32 %s61, 1
      %p65 = scmp.eq.s32.totalorder %s15, 1
      %p66 = scmp.ne.s32.totalorder %s61, %s63
      %p67 = scmp.eq.s32.totalorder %s15, 0
      %p68 = por %p66, %p67
      %p69 = scmp.ne.s32.totalorder %s61, %s63
      %p70 = scmp.eq.s32.totalorder %s20, 1
      %p71 = por %p69, %p70
      %p72 = scmp.ne.s32.totalorder %s63, %s64
      %p73 = scmp.eq.s32.totalorder %s20, 0
      %p74 = por %p72, %p73
      %p75 = scmp.ne.s32.totalorder %s63, %s64
      %p76 = scmp.eq.s32.totalorder %s21, 1
      %p77 = por %p75, %p76
      %p79 = scmp.ne.s32.totalorder %s64, %s78
      %p80 = scmp.eq.s32.totalorder %s21, 0
      %p81 = por %p79, %p80
      %s83 = sadd.s32 %s82, 1
      %p86 = scmp.eq.s32.totalorder %s15, 1
      %p87 = scmp.ne.s32.totalorder %s82, %s84
      %p88 = scmp.eq.s32.totalorder %s15, 0
      %p89 = por %p87, %p88
      %p90 = scmp.ne.s32.totalorder %s82, %s84
      %p91 = scmp.eq.s32.totalorder %s20, 1
      %p92 = por %p90, %p91
      %p93 = scmp.ne.s32.totalorder %s84, %s85
      %p94 = scmp.eq.s32.totalorder %s20, 0
      %p95 = por %p93, %p94
      %p96 = scmp.ne.s32.totalorder %s84, %s85
      %p97 = scmp.eq.s32.totalorder %s21, 1
      %p98 = por %p96, %p97
      %p100 = scmp.ne.s32.totalorder %s85, %s99
      %p101 = scmp.eq.s32.totalorder %s21, 0
      %p102 = por %p100, %p101
      %s104 = sadd.s32 %s103, 1
      %p107 = scmp.eq.s32.totalorder %s15, 1
      %p108 = scmp.ne.s32.totalorder %s103, %s105
      %p109 = scmp.eq.s32.totalorder %s15, 0
      %p110 = por %p108, %p109
      %p111 = scmp.ne.s32.totalorder %s103, %s105
      %p112 = scmp.eq.s32.totalorder %s20, 1
      %p113 = por %p111, %p112
      %p114 = scmp.ne.s32.totalorder %s105, %s106
      %p115 = scmp.eq.s32.totalorder %s20, 0
      %p116 = por %p114, %p115
      %p117 = scmp.ne.s32.totalorder %s105, %s106
      %p118 = scmp.eq.s32.totalorder %s21, 1
      %p119 = por %p117, %p118
      %p121 = scmp.ne.s32.totalorder %s106, %s120
      %p122 = scmp.eq.s32.totalorder %s21, 0
      %p123 = por %p121, %p122
      %s125 = sadd.s32 %s124, 1
      %p128 = scmp.eq.s32.totalorder %s15, 1
      %p129 = scmp.ne.s32.totalorder %s124, %s126
      %p130 = scmp.eq.s32.totalorder %s15, 0
      %p131 = por %p129, %p130
      %p132 = scmp.ne.s32.totalorder %s124, %s126
      %p133 = scmp.eq.s32.totalorder %s20, 1
      %p134 = por %p132, %p133
      %p135 = scmp.ne.s32.totalorder %s126, %s127
      %p136 = scmp.eq.s32.totalorder %s20, 0
      %p137 = por %p135, %p136
      %p138 = scmp.ne.s32.totalorder %s126, %s127
      %p139 = scmp.eq.s32.totalorder %s21, 1
      %p140 = por %p138, %p139
      %p142 = scmp.ne.s32.totalorder %s127, %s141
      %p143 = scmp.eq.s32.totalorder %s21, 0
      %p144 = por %p142, %p143
      %s146 = sadd.s32 %s145, 1
      %p149 = scmp.eq.s32.totalorder %s15, 1
      %p150 = scmp.ne.s32.totalorder %s145, %s147
      %p151 = scmp.eq.s32.totalorder %s15, 0
      %p152 = por %p150, %p151
      %p153 = scmp.ne.s32.totalorder %s145, %s147
      %p154 = scmp.eq.s32.totalorder %s20, 1
      %p155 = por %p153, %p154
      %p156 = scmp.ne.s32.totalorder %s147, %s148
      %p157 = scmp.eq.s32.totalorder %s20, 0
      %p158 = por %p156, %p157
      %p159 = scmp.ne.s32.totalorder %s147, %s148
      %p160 = scmp.eq.s32.totalorder %s21, 1
      %p161 = por %p159, %p160
      %p163 = scmp.ne.s32.totalorder %s148, %s162
      %p164 = scmp.eq.s32.totalorder %s21, 0
      %p165 = por %p163, %p164
      %s166 = ssub.s32 %s22, %s34
      %s167 = ssub.s32 %s23, %s30
      %s168 = sor.u32 %s166, %s167
      %p169 = scmp.eq.s32.totalorder %s168, 0
      %s171 = sadd.s32 %s170, 1
      %s172 = scalar_select %p169, %s170, %s171
      %p175 = pneg %p169
      %p176 = scmp.eq.s32.totalorder %s15, 1
      %p177 = por %p175, %p176
      %p178 = scmp.ne.s32.totalorder %s170, %s173
      %p179 = scmp.eq.s32.totalorder %s15, 0
      %p180 = por %p178, %p179
      %p181 = scmp.ne.s32.totalorder %s170, %s173
      %p182 = scmp.eq.s32.totalorder %s20, 1
      %p183 = por %p181, %p182
      %p184 = scmp.ne.s32.totalorder %s173, %s174
      %p185 = scmp.eq.s32.totalorder %s20, 0
      %p186 = por %p184, %p185
      %p187 = scmp.ne.s32.totalorder %s173, %s174
      %p188 = scmp.eq.s32.totalorder %s21, 1
      %p189 = por %p187, %p188
      %p191 = scmp.ne.s32.totalorder %s174, %s190
      %p192 = scmp.eq.s32.totalorder %s21, 0
      %p193 = por %p191, %p192
      %p194 = scmp.le.s32.totalorder 1, %s15
      %p195 = scmp.lt.s32.totalorder %s15, 3
      %p196 = pnand %p194, %p195
      %p197 = pneg %p196
      // Predicated region
      $region9: #{tpu_custom_call.1} parent=5 // pred_check
        _
      $region10: #{tpu_custom_call.1} parent=5 // pred_check_branch
        %199 = sbr.rel (%p196) target = $region12
      $region11: #{tpu_custom_call.1} parent=5 // pred_region
        %s200 = ssub.s32 %s15, 1
        // Predicated region
        $region13: #{tpu_custom_call.1} parent=11 // pred_check
          %p201 = pneg %p74
        $region14: #{tpu_custom_call.1} parent=11 // pred_check_branch
          %203 = sbr.rel (%p201) target = $region16
        $region15: #{tpu_custom_call.1} parent=11 // pred_region
          _
        $region16: #{tpu_custom_call.1} parent=11 // pred_fallthru
          _
        // Predicated region
        $region17: #{tpu_custom_call.1} parent=11 // pred_check
          %p204 = pneg %p95
        $region18: #{tpu_custom_call.1} parent=11 // pred_check_branch
          %206 = sbr.rel (%p204) target = $region20
        $region19: #{tpu_custom_call.1} parent=11 // pred_region
          _
        $region20: #{tpu_custom_call.1} parent=11 // pred_fallthru
          _
        // Predicated region
        $region21: #{tpu_custom_call.1} parent=11 // pred_check
          %p207 = pneg %p116
        $region22: #{tpu_custom_call.1} parent=11 // pred_check_branch
          %209 = sbr.rel (%p207) target = $region24
        $region23: #{tpu_custom_call.1} parent=11 // pred_region
          _
        $region24: #{tpu_custom_call.1} parent=11 // pred_fallthru
          _
        // Predicated region
        $region25: #{tpu_custom_call.1} parent=11 // pred_check
          %p210 = pneg %p137
        $region26: #{tpu_custom_call.1} parent=11 // pred_check_branch
          %212 = sbr.rel (%p210) target = $region28
        $region27: #{tpu_custom_call.1} parent=11 // pred_region
          _
        $region28: #{tpu_custom_call.1} parent=11 // pred_fallthru
          _
        // Predicated region
        $region29: #{tpu_custom_call.1} parent=11 // pred_check
          %p213 = pneg %p158
        $region30: #{tpu_custom_call.1} parent=11 // pred_check_branch
          %215 = sbr.rel (%p213) target = $region32
        $region31: #{tpu_custom_call.1} parent=11 // pred_region
          _
        $region32: #{tpu_custom_call.1} parent=11 // pred_fallthru
          _
      $region12: #{tpu_custom_call.1} parent=5 // pred_fallthru
        _
      %p216 = scmp.lt.s32.totalorder %s15, 2
      // Predicated region
      $region33: #{tpu_custom_call.1} parent=5 // pred_check
        %p217 = pneg %p216
      $region34: #{tpu_custom_call.1} parent=5 // pred_check_branch
        %219 = sbr.rel (%p217) target = $region36
      $region35: #{tpu_custom_call.1} parent=5 // pred_region
        // Predicated region
        $region37: #{tpu_custom_call.1} parent=35 // pred_check
          %p220 = pneg %p47
        $region38: #{tpu_custom_call.1} parent=35 // pred_check_branch
          %222 = sbr.rel (%p220) target = $region40
        $region39: #{tpu_custom_call.1} parent=35 // pred_region
          %p223 = scmp.lt.s32.totalorder %s22, 1
          %s224 = scalar_select %p223, %s22, 1
          %s225 = smul.addr %s224, 2
          %s226 = smul.addr %s225, 4
          %s227 = scalar_lea.vmem %s0, %s226
        $region40: #{tpu_custom_call.1} parent=35 // pred_fallthru
          _
      $region36: #{tpu_custom_call.1} parent=5 // pred_fallthru
        _
      %p228 = scmp.le.s32.totalorder 1, %s15
      %p229 = scmp.lt.s32.totalorder %s15, 3
      %p230 = pnand %p228, %p229
      %p231 = pneg %p230
      // Predicated region
      $region41: #{tpu_custom_call.1} parent=5 // pred_check
        _
      $region42: #{tpu_custom_call.1} parent=5 // pred_check_branch
        %233 = sbr.rel (%p230) target = $region44
      $region43: #{tpu_custom_call.1} parent=5 // pred_region
        %s234 = ssub.s32 %s15, 1
        %p235 = scmp.lt.s32.totalorder %s24, 1
        %s236 = scalar_select %p235, %s24, 1
        %s237 = smul.addr %s236, 2
        %s238 = smul.addr %s237, 4
        %s239 = scalar_lea.vmem %s0, %s238
        %p240 = pneg %p53
        %p241 = pneg %p50
        %p242 = pneg %p74
        %p243 = pneg %p71
        %p244 = pneg %p95
        %p245 = pneg %p92
        %p246 = pneg %p116
        %p247 = pneg %p113
        %p248 = pneg %p137
        %p249 = pneg %p134
        %p250 = pneg %p158
        %p251 = pneg %p155
        %p252 = pneg %p186
        %p253 = pneg %p183
        %s254 = sand.u32 %s173, 1
        %s255 = scalar_lea.sflag [#allocation5], %s254
        %s256 = sand.u32 %s173, 1
        %s257 = smul.addr %s256, 16
        %s258 = scalar_lea.vmem [#allocation4], %s257
        %p259 = scmp.lt.s32.totalorder %s24, 1
        %s260 = scalar_select %p259, %s24, 1
        %s261 = smul.addr %s260, 2
        %s262 = smul.addr %s261, 4
        %s263 = scalar_lea.vmem %s0, %s262
        %s264 = smul.u32 2, %s25
        %p266 = scmp.eq.s32.totalorder %s25, 0
        // Predicated region
        $region45: #{tpu_custom_call.1} parent=43 // pred_check
          %p267 = pneg %p266
        $region46: #{tpu_custom_call.1} parent=43 // pred_check_branch
          %269 = sbr.rel (%p267) target = $region48
        $region47: #{tpu_custom_call.1} parent=43 // pred_region
          %v270 = vld [vmem:[%s263] sm:$0xf]
          %v271 = vld [vmem:[%s263 + $0x4] sm:$0xf]
          %v272 = vld [vmem:[%s2] sm:$0xf]
          %v273 = vld [vmem:[%s2 + $0x4] sm:$0xf]
          %v274 = vld [vmem:[%s2 + $0x8] sm:$0xf]
          %v275 = vld [vmem:[%s2 + $0xc] sm:$0xf]
          %v278 = vunpack.c.l.b16 %v270
          %v279 = vunpack.c.l.b16 %v271
          %v280 = vpack.c.b16 %v279, %v278
          %v285 = vunpack.c.l.b16 %v272
          %v286 = vunpack.c.l.b16 %v273
          %v287 = vunpack.c.l.b16 %v274
          %v288 = vunpack.c.l.b16 %v275
          %v289 = vpack.c.b16 %v286, %v285
          %v290 = vpack.c.b16 %v288, %v287
          %vm293 = vcmask 261120
          %v295 = vsel %vm293, %v280, 0
          %297 = vmatprep.subr.bf16.mxu0 0
          %298 = vmatpush1.bf16.msra.mxu0 %v289
          %299 = vmatprep.subr.bf16.mxu0 0
          %300 = vmatpush1.bf16.msra.mxu0 %v290
          %301 = vmatprep.subr.bf16.mxu0 0
          %302 = vmatpush1.bf16.msra.mxu0 0
          %303 = vmatprep.subr.bf16.mxu0 0
          %304 = vmatpush1.bf16.msra.mxu0 0
          %305 = vmatprep.subr.bf16.mxu0 0
          %306 = vmatpush1.bf16.msra.mxu0 0
          %307 = vmatprep.subr.bf16.mxu0 0
          %308 = vmatpush1.bf16.msra.mxu0 0
          %309 = vmatprep.subr.bf16.mxu0 0
          %310 = vmatpush1.bf16.msra.mxu0 0
          %311 = vmatprep.subr.bf16.mxu0 0
          %312 = vmatpush1.bf16.msra.mxu0 0
          %313 = vmatprep.subr.bf16.mxu0 0
          %314 = vmatpush1.bf16.msra.mxu0 0
          %315 = vmatprep.subr.bf16.mxu0 0
          %316 = vmatpush1.bf16.msra.mxu0 0
          %317 = vmatprep.subr.bf16.mxu0 0
          %318 = vmatpush1.bf16.msra.mxu0 0
          %319 = vmatprep.subr.bf16.mxu0 0
          %320 = vmatpush1.bf16.msra.mxu0 0
          %321 = vmatprep.subr.bf16.mxu0 0
          %322 = vmatpush1.bf16.msra.mxu0 0
          %323 = vmatprep.subr.bf16.mxu0 0
          %324 = vmatpush1.bf16.msra.mxu0 0
          %325 = vmatprep.subr.bf16.mxu0 0
          %326 = vmatpush1.bf16.msra.mxu0 0
          %327 = vmatprep.subr.bf16.mxu0 0
          %328 = vmatpush1.bf16.msra.mxu0 0
          %329 = vmatprep.mubr.bf16.mxu0 0
          %330 = vmatmul.mubr.bf16.gmra.mrb[0].mxu0 %v295
          %v331 = vpop.f32.mrb[0].mxu0
          %v332 = vadd.f32 0.0, %v331
          %v333 = vpop.f32.mrb[0].mxu0
          %v334 = vpop.f32.mrb[0].mxu0
          %v335 = vadd.f32 0.0, %v334
          %v336 = vpop.f32.mrb[0].mxu0
          %337 = vdwg.mxu0
          %v338 = vpack.c.bf16 %v335, %v332
          %vm339 = vcmask 64512
          %340 = vst.msk [vmem:[#allocation2] sm:$0xff] %vm339, %v338
          %v341 = vld [vmem:[%s3] sm:$0xf]
          %v342 = vld [vmem:[%s3 + $0x4] sm:$0xf]
          %v343 = vld [vmem:[%s3 + $0x8] sm:$0xf]
          %v344 = vld [vmem:[%s3 + $0xc] sm:$0xf]
          %v349 = vunpack.c.l.b16 %v341
          %v350 = vunpack.c.l.b16 %v342
          %v351 = vunpack.c.l.b16 %v343
          %v352 = vunpack.c.l.b16 %v344
          %v353 = vpack.c.b16 %v350, %v349
          %v354 = vpack.c.b16 %v352, %v351
          %357 = vmatprep.subr.bf16.mxu0 0
          %358 = vmatpush1.bf16.msra.mxu0 %v353
          %359 = vmatprep.subr.bf16.mxu0 0
          %360 = vmatpush1.bf16.msra.mxu0 %v354
          %361 = vmatprep.subr.bf16.mxu0 0
          %362 = vmatpush1.bf16.msra.mxu0 0
          %363 = vmatprep.subr.bf16.mxu0 0
          %364 = vmatpush1.bf16.msra.mxu0 0
          %365 = vmatprep.subr.bf16.mxu0 0
          %366 = vmatpush1.bf16.msra.mxu0 0
          %367 = vmatprep.subr.bf16.mxu0 0
          %368 = vmatpush1.bf16.msra.mxu0 0
          %369 = vmatprep.subr.bf16.mxu0 0
          %370 = vmatpush1.bf16.msra.mxu0 0
          %371 = vmatprep.subr.bf16.mxu0 0
          %372 = vmatpush1.bf16.msra.mxu0 0
          %373 = vmatprep.subr.bf16.mxu0 0
          %374 = vmatpush1.bf16.msra.mxu0 0
          %375 = vmatprep.subr.bf16.mxu0 0
          %376 = vmatpush1.bf16.msra.mxu0 0
          %377 = vmatprep.subr.bf16.mxu0 0
          %378 = vmatpush1.bf16.msra.mxu0 0
          %379 = vmatprep.subr.bf16.mxu0 0
          %380 = vmatpush1.bf16.msra.mxu0 0
          %381 = vmatprep.subr.bf16.mxu0 0
          %382 = vmatpush1.bf16.msra.mxu0 0
          %383 = vmatprep.subr.bf16.mxu0 0
          %384 = vmatpush1.bf16.msra.mxu0 0
          %385 = vmatprep.subr.bf16.mxu0 0
          %386 = vmatpush1.bf16.msra.mxu0 0
          %387 = vmatprep.subr.bf16.mxu0 0
          %388 = vmatpush1.bf16.msra.mxu0 0
          %389 = vmatprep.mubr.bf16.mxu0 0
          %390 = vmatmul.mubr.bf16.gmra.mrb[0].mxu0 %v295
          %v391 = vpop.f32.mrb[0].mxu0
          %v392 = vadd.f32 0.0, %v391
          %v393 = vpop.f32.mrb[0].mxu0
          %v394 = vpop.f32.mrb[0].mxu0
          %v395 = vadd.f32 0.0, %v394
          %v396 = vpop.f32.mrb[0].mxu0
          %397 = vdwg.mxu0
          %v398 = vpack.c.bf16 %v395, %v392
          %399 = vst.msk [vmem:[#allocation3] sm:$0xff] %vm339, %v398
          %s400 = scalar_lea.vmem %s2, 16
          %v401 = vld [vmem:[%s400] sm:$0xf]
          %v402 = vld [vmem:[%s400 + $0x4] sm:$0xf]
          %v403 = vld [vmem:[%s400 + $0x8] sm:$0xf]
          %v404 = vld [vmem:[%s400 + $0xc] sm:$0xf]
          %v409 = vunpack.c.l.b16 %v401
          %v410 = vunpack.c.l.b16 %v402
          %v411 = vunpack.c.l.b16 %v403
          %v412 = vunpack.c.l.b16 %v404
          %v413 = vpack.c.b16 %v410, %v409
          %v414 = vpack.c.b16 %v412, %v411
          %417 = vmatprep.subr.bf16.mxu0 0
          %418 = vmatpush1.bf16.msra.mxu0 %v413
          %419 = vmatprep.subr.bf16.mxu0 0
          %420 = vmatpush1.bf16.msra.mxu0 %v414
          %421 = vmatprep.subr.bf16.mxu0 0
          %422 = vmatpush1.bf16.msra.mxu0 0
          %423 = vmatprep.subr.bf16.mxu0 0
          %424 = vmatpush1.bf16.msra.mxu0 0
          %425 = vmatprep.subr.bf16.mxu0 0
          %426 = vmatpush1.bf16.msra.mxu0 0
          %427 = vmatprep.subr.bf16.mxu0 0
          %428 = vmatpush1.bf16.msra.mxu0 0
          %429 = vmatprep.subr.bf16.mxu0 0
          %430 = vmatpush1.bf16.msra.mxu0 0
          %431 = vmatprep.subr.bf16.mxu0 0
          %432 = vmatpush1.bf16.msra.mxu0 0
          %433 = vmatprep.subr.bf16.mxu0 0
          %434 = vmatpush1.bf16.msra.mxu0 0
          %435 = vmatprep.subr.bf16.mxu0 0
          %436 = vmatpush1.bf16.msra.mxu0 0
          %437 = vmatprep.subr.bf16.mxu0 0
          %438 = vmatpush1.bf16.msra.mxu0 0
          %439 = vmatprep.subr.bf16.mxu0 0
          %440 = vmatpush1.bf16.msra.mxu0 0
          %441 = vmatprep.subr.bf16.mxu0 0
          %442 = vmatpush1.bf16.msra.mxu0 0
          %443 = vmatprep.subr.bf16.mxu0 0
          %444 = vmatpush1.bf16.msra.mxu0 0
          %445 = vmatprep.subr.bf16.mxu0 0
          %446 = vmatpush1.bf16.msra.mxu0 0
          %447 = vmatprep.subr.bf16.mxu0 0
          %448 = vmatpush1.bf16.msra.mxu0 0
          %449 = vmatprep.mubr.bf16.mxu0 0
          %450 = vmatmul.mubr.bf16.gmra.mrb[0].mxu0 %v295
          %v451 = vpop.f32.mrb[0].mxu0
          %v452 = vadd.f32 0.0, %v451
          %v453 = vpop.f32.mrb[0].mxu0
          %v454 = vpop.f32.mrb[0].mxu0
          %v455 = vadd.f32 0.0, %v454
          %v456 = vpop.f32.mrb[0].mxu0
          %457 = vdwg.mxu0
          %v458 = vpack.c.bf16 %v455, %v452
          %s459 = scalar_lea.vmem [#allocation2], 8
          %460 = vst.msk [vmem:[%s459] sm:$0xff] %vm339, %v458
          %s461 = scalar_lea.vmem %s3, 16
          %v462 = vld [vmem:[%s461] sm:$0xf]
          %v463 = vld [vmem:[%s461 + $0x4] sm:$0xf]
          %v464 = vld [vmem:[%s461 + $0x8] sm:$0xf]
          %v465 = vld [vmem:[%s461 + $0xc] sm:$0xf]
          %v470 = vunpack.c.l.b16 %v462
          %v471 = vunpack.c.l.b16 %v463
          %v472 = vunpack.c.l.b16 %v464
          %v473 = vunpack.c.l.b16 %v465
          %v474 = vpack.c.b16 %v471, %v470
          %v475 = vpack.c.b16 %v473, %v472
          %478 = vmatprep.subr.bf16.mxu0 0
          %479 = vmatpush1.bf16.msra.mxu0 %v474
          %480 = vmatprep.subr.bf16.mxu0 0
          %481 = vmatpush1.bf16.msra.mxu0 %v475
          %482 = vmatprep.subr.bf16.mxu0 0
          %483 = vmatpush1.bf16.msra.mxu0 0
          %484 = vmatprep.subr.bf16.mxu0 0
          %485 = vmatpush1.bf16.msra.mxu0 0
          %486 = vmatprep.subr.bf16.mxu0 0
          %487 = vmatpush1.bf16.msra.mxu0 0
          %488 = vmatprep.subr.bf16.mxu0 0
          %489 = vmatpush1.bf16.msra.mxu0 0
          %490 = vmatprep.subr.bf16.mxu0 0
          %491 = vmatpush1.bf16.msra.mxu0 0
          %492 = vmatprep.subr.bf16.mxu0 0
          %493 = vmatpush1.bf16.msra.mxu0 0
          %494 = vmatprep.subr.bf16.mxu0 0
          %495 = vmatpush1.bf16.msra.mxu0 0
          %496 = vmatprep.subr.bf16.mxu0 0
          %497 = vmatpush1.bf16.msra.mxu0 0
          %498 = vmatprep.subr.bf16.mxu0 0
          %499 = vmatpush1.bf16.msra.mxu0 0
          %500 = vmatprep.subr.bf16.mxu0 0
          %501 = vmatpush1.bf16.msra.mxu0 0
          %502 = vmatprep.subr.bf16.mxu0 0
          %503 = vmatpush1.bf16.msra.mxu0 0
          %504 = vmatprep.subr.bf16.mxu0 0
          %505 = vmatpush1.bf16.msra.mxu0 0
          %506 = vmatprep.subr.bf16.mxu0 0
          %507 = vmatpush1.bf16.msra.mxu0 0
          %508 = vmatprep.subr.bf16.mxu0 0
          %509 = vmatpush1.bf16.msra.mxu0 0
          %510 = vmatprep.mubr.bf16.mxu0 0
          %511 = vmatmul.mubr.bf16.gmra.mrb[0].mxu0 %v295
          %v512 = vpop.f32.mrb[0].mxu0
          %v513 = vadd.f32 0.0, %v512
          %v514 = vpop.f32.mrb[0].mxu0
          %v515 = vpop.f32.mrb[0].mxu0
          %v516 = vadd.f32 0.0, %v515
          %v517 = vpop.f32.mrb[0].mxu0
          %518 = vdwg.mxu0
          %v519 = vpack.c.bf16 %v516, %v513
          %s520 = scalar_lea.vmem [#allocation3], 8
          %521 = vst.msk [vmem:[%s520] sm:$0xff] %vm339, %v519
          %s522 = scalar_lea.vmem %s2, 32
          %v523 = vld [vmem:[%s522] sm:$0xf]
          %v524 = vld [vmem:[%s522 + $0x4] sm:$0xf]
          %v525 = vld [vmem:[%s522 + $0x8] sm:$0xf]
          %v526 = vld [vmem:[%s522 + $0xc] sm:$0xf]
          %v531 = vunpack.c.l.b16 %v523
          %v532 = vunpack.c.l.b16 %v524
          %v533 = vunpack.c.l.b16 %v525
          %v534 = vunpack.c.l.b16 %v526
          %v535 = vpack.c.b16 %v532, %v531
          %v536 = vpack.c.b16 %v534, %v533
          %539 = vmatprep.subr.bf16.mxu0 0
          %540 = vmatpush1.bf16.msra.mxu0 %v535
          %541 = vmatprep.subr.bf16.mxu0 0
          %542 = vmatpush1.bf16.msra.mxu0 %v536
          %543 = vmatprep.subr.bf16.mxu0 0
          %544 = vmatpush1.bf16.msra.mxu0 0
          %545 = vmatprep.subr.bf16.mxu0 0
          %546 = vmatpush1.bf16.msra.mxu0 0
          %547 = vmatprep.subr.bf16.mxu0 0
          %548 = vmatpush1.bf16.msra.mxu0 0
          %549 = vmatprep.subr.bf16.mxu0 0
          %550 = vmatpush1.bf16.msra.mxu0 0
          %551 = vmatprep.subr.bf16.mxu0 0
          %552 = vmatpush1.bf16.msra.mxu0 0
          %553 = vmatprep.subr.bf16.mxu0 0
          %554 = vmatpush1.bf16.msra.mxu0 0
          %555 = vmatprep.subr.bf16.mxu0 0
          %556 = vmatpush1.bf16.msra.mxu0 0
          %557 = vmatprep.subr.bf16.mxu0 0
          %558 = vmatpush1.bf16.msra.mxu0 0
          %559 = vmatprep.subr.bf16.mxu0 0
          %560 = vmatpush1.bf16.msra.mxu0 0
          %561 = vmatprep.subr.bf16.mxu0 0
          %562 = vmatpush1.bf16.msra.mxu0 0
          %563 = vmatprep.subr.bf16.mxu0 0
          %564 = vmatpush1.bf16.msra.mxu0 0
          %565 = vmatprep.subr.bf16.mxu0 0
          %566 = vmatpush1.bf16.msra.mxu0 0
          %567 = vmatprep.subr.bf16.mxu0 0
          %568 = vmatpush1.bf16.msra.mxu0 0
          %569 = vmatprep.subr.bf16.mxu0 0
          %570 = vmatpush1.bf16.msra.mxu0 0
          %571 = vmatprep.mubr.bf16.mxu0 0
          %572 = vmatmul.mubr.bf16.gmra.mrb[0].mxu0 %v295
          %v573 = vpop.f32.mrb[0].mxu0
          %v574 = vadd.f32 0.0, %v573
          %v575 = vpop.f32.mrb[0].mxu0
          %v576 = vpop.f32.mrb[0].mxu0
          %v577 = vadd.f32 0.0, %v576
          %v578 = vpop.f32.mrb[0].mxu0
          %579 = vdwg.mxu0
          %v580 = vpack.c.bf16 %v577, %v574
          %s581 = scalar_lea.vmem [#allocation2], 16
          %582 = vst.msk [vmem:[%s581] sm:$0xff] %vm339, %v580
          %s583 = scalar_lea.vmem %s3, 32
          %v584 = vld [vmem:[%s583] sm:$0xf]
          %v585 = vld [vmem:[%s583 + $0x4] sm:$0xf]
          %v586 = vld [vmem:[%s583 + $0x8] sm:$0xf]
          %v587 = vld [vmem:[%s583 + $0xc] sm:$0xf]
          %v592 = vunpack.c.l.b16 %v584
          %v593 = vunpack.c.l.b16 %v585
          %v594 = vunpack.c.l.b16 %v586
          %v595 = vunpack.c.l.b16 %v587
          %v596 = vpack.c.b16 %v593, %v592
          %v597 = vpack.c.b16 %v595, %v594
          %600 = vmatprep.subr.bf16.mxu0 0
          %601 = vmatpush1.bf16.msra.mxu0 %v596
          %602 = vmatprep.subr.bf16.mxu0 0
          %603 = vmatpush1.bf16.msra.mxu0 %v597
          %604 = vmatprep.subr.bf16.mxu0 0
          %605 = vmatpush1.bf16.msra.mxu0 0
          %606 = vmatprep.subr.bf16.mxu0 0
          %607 = vmatpush1.bf16.msra.mxu0 0
          %608 = vmatprep.subr.bf16.mxu0 0
          %609 = vmatpush1.bf16.msra.mxu0 0
          %610 = vmatprep.subr.bf16.mxu0 0
          %611 = vmatpush1.bf16.msra.mxu0 0
          %612 = vmatprep.subr.bf16.mxu0 0
          %613 = vmatpush1.bf16.msra.mxu0 0
          %614 = vmatprep.subr.bf16.mxu0 0
          %615 = vmatpush1.bf16.msra.mxu0 0
          %616 = vmatprep.subr.bf16.mxu0 0
          %617 = vmatpush1.bf16.msra.mxu0 0
          %618 = vmatprep.subr.bf16.mxu0 0
          %619 = vmatpush1.bf16.msra.mxu0 0
          %620 = vmatprep.subr.bf16.mxu0 0
          %621 = vmatpush1.bf16.msra.mxu0 0
          %622 = vmatprep.subr.bf16.mxu0 0
          %623 = vmatpush1.bf16.msra.mxu0 0
          %624 = vmatprep.subr.bf16.mxu0 0
          %625 = vmatpush1.bf16.msra.mxu0 0
          %626 = vmatprep.subr.bf16.mxu0 0
          %627 = vmatpush1.bf16.msra.mxu0 0
          %628 = vmatprep.subr.bf16.mxu0 0
          %629 = vmatpush1.bf16.msra.mxu0 0
          %630 = vmatprep.subr.bf16.mxu0 0
          %631 = vmatpush1.bf16.msra.mxu0 0
          %632 = vmatprep.mubr.bf16.mxu0 0
          %633 = vmatmul.mubr.bf16.gmra.mrb[0].mxu0 %v295
          %v634 = vpop.f32.mrb[0].mxu0
          %v635 = vadd.f32 0.0, %v634
          %v636 = vpop.f32.mrb[0].mxu0
          %v637 = vpop.f32.mrb[0].mxu0
          %v638 = vadd.f32 0.0, %v637
          %v639 = vpop.f32.mrb[0].mxu0
          %640 = vdwg.mxu0
          %v641 = vpack.c.bf16 %v638, %v635
          %s642 = scalar_lea.vmem [#allocation3], 16
          %643 = vst.msk [vmem:[%s642] sm:$0xff] %vm339, %v641
          %s644 = scalar_lea.vmem %s2, 48
          %v645 = vld [vmem:[%s644] sm:$0xf]
          %v646 = vld [vmem:[%s644 + $0x4] sm:$0xf]
          %v647 = vld [vmem:[%s644 + $0x8] sm:$0xf]
          %v648 = vld [vmem:[%s644 + $0xc] sm:$0xf]
          %v653 = vunpack.c.l.b16 %v645
          %v654 = vunpack.c.l.b16 %v646
          %v655 = vunpack.c.l.b16 %v647
          %v656 = vunpack.c.l.b16 %v648
          %v657 = vpack.c.b16 %v654, %v653
          %v658 = vpack.c.b16 %v656, %v655
          %661 = vmatprep.subr.bf16.mxu0 0
          %662 = vmatpush1.bf16.msra.mxu0 %v657
          %663 = vmatprep.subr.bf16.mxu0 0
          %664 = vmatpush1.bf16.msra.mxu0 %v658
          %665 = vmatprep.subr.bf16.mxu0 0
          %666 = vmatpush1.bf16.msra.mxu0 0
          %667 = vmatprep.subr.bf16.mxu0 0
          %668 = vmatpush1.bf16.msra.mxu0 0
          %669 = vmatprep.subr.bf16.mxu0 0
          %670 = vmatpush1.bf16.msra.mxu0 0
          %671 = vmatprep.subr.bf16.mxu0 0
          %672 = vmatpush1.bf16.msra.mxu0 0
          %673 = vmatprep.subr.bf16.mxu0 0
          %674 = vmatpush1.bf16.msra.mxu0 0
          %675 = vmatprep.subr.bf16.mxu0 0
          %676 = vmatpush1.bf16.msra.mxu0 0
          %677 = vmatprep.subr.bf16.mxu0 0
          %678 = vmatpush1.bf16.msra.mxu0 0
          %679 = vmatprep.subr.bf16.mxu0 0
          %680 = vmatpush1.bf16.msra.mxu0 0
          %681 = vmatprep.subr.bf16.mxu0 0
          %682 = vmatpush1.bf16.msra.mxu0 0
          %683 = vmatprep.subr.bf16.mxu0 0
          %684 = vmatpush1.bf16.msra.mxu0 0
          %685 = vmatprep.subr.bf16.mxu0 0
          %686 = vmatpush1.bf16.msra.mxu0 0
          %687 = vmatprep.subr.bf16.mxu0 0
          %688 = vmatpush1.bf16.msra.mxu0 0
          %689 = vmatprep.subr.bf16.mxu0 0
          %690 = vmatpush1.bf16.msra.mxu0 0
          %691 = vmatprep.subr.bf16.mxu0 0
          %692 = vmatpush1.bf16.msra.mxu0 0
          %693 = vmatprep.mubr.bf16.mxu0 0
          %694 = vmatmul.mubr.bf16.gmra.mrb[0].mxu0 %v295
          %v695 = vpop.f32.mrb[0].mxu0
          %v696 = vadd.f32 0.0, %v695
          %v697 = vpop.f32.mrb[0].mxu0
          %v698 = vpop.f32.mrb[0].mxu0
          %v699 = vadd.f32 0.0, %v698
          %v700 = vpop.f32.mrb[0].mxu0
          %701 = vdwg.mxu0
          %v702 = vpack.c.bf16 %v699, %v696
          %s703 = scalar_lea.vmem [#allocation2], 24
          %704 = vst.msk [vmem:[%s703] sm:$0xff] %vm339, %v702
          %s705 = scalar_lea.vmem %s3, 48
          %v706 = vld [vmem:[%s705] sm:$0xf]
          %v707 = vld [vmem:[%s705 + $0x4] sm:$0xf]
          %v708 = vld [vmem:[%s705 + $0x8] sm:$0xf]
          %v709 = vld [vmem:[%s705 + $0xc] sm:$0xf]
          %v714 = vunpack.c.l.b16 %v706
          %v715 = vunpack.c.l.b16 %v707
          %v716 = vunpack.c.l.b16 %v708
          %v717 = vunpack.c.l.b16 %v709
          %v718 = vpack.c.b16 %v715, %v714
          %v719 = vpack.c.b16 %v717, %v716
          %722 = vmatprep.subr.bf16.mxu0 0
          %723 = vmatpush1.bf16.msra.mxu0 %v718
          %724 = vmatprep.subr.bf16.mxu0 0
          %725 = vmatpush1.bf16.msra.mxu0 %v719
          %726 = vmatprep.subr.bf16.mxu0 0
          %727 = vmatpush1.bf16.msra.mxu0 0
          %728 = vmatprep.subr.bf16.mxu0 0
          %729 = vmatpush1.bf16.msra.mxu0 0
          %730 = vmatprep.subr.bf16.mxu0 0
          %731 = vmatpush1.bf16.msra.mxu0 0
          %732 = vmatprep.subr.bf16.mxu0 0
          %733 = vmatpush1.bf16.msra.mxu0 0
          %734 = vmatprep.subr.bf16.mxu0 0
          %735 = vmatpush1.bf16.msra.mxu0 0
          %736 = vmatprep.subr.bf16.mxu0 0
          %737 = vmatpush1.bf16.msra.mxu0 0
          %738 = vmatprep.subr.bf16.mxu0 0
          %739 = vmatpush1.bf16.msra.mxu0 0
          %740 = vmatprep.subr.bf16.mxu0 0
          %741 = vmatpush1.bf16.msra.mxu0 0
          %742 = vmatprep.subr.bf16.mxu0 0
          %743 = vmatpush1.bf16.msra.mxu0 0
          %744 = vmatprep.subr.bf16.mxu0 0
          %745 = vmatpush1.bf16.msra.mxu0 0
          %746 = vmatprep.subr.bf16.mxu0 0
          %747 = vmatpush1.bf16.msra.mxu0 0
          %748 = vmatprep.subr.bf16.mxu0 0
          %749 = vmatpush1.bf16.msra.mxu0 0
          %750 = vmatprep.subr.bf16.mxu0 0
          %751 = vmatpush1.bf16.msra.mxu0 0
          %752 = vmatprep.subr.bf16.mxu0 0
          %753 = vmatpush1.bf16.msra.mxu0 0
          %754 = vmatprep.mubr.bf16.mxu0 0
          %755 = vmatmul.mubr.bf16.gmra.mrb[0].mxu0 %v295
          %v756 = vpop.f32.mrb[0].mxu0
          %v757 = vadd.f32 0.0, %v756
          %v758 = vpop.f32.mrb[0].mxu0
          %v759 = vpop.f32.mrb[0].mxu0
          %v760 = vadd.f32 0.0, %v759
          %v761 = vpop.f32.mrb[0].mxu0
          %762 = vdwg.mxu0
          %v763 = vpack.c.bf16 %v760, %v757
          %s764 = scalar_lea.vmem [#allocation3], 24
          %765 = vst.msk [vmem:[%s764] sm:$0xff] %vm339, %v763
        $region48: #{tpu_custom_call.1} parent=43 // pred_fallthru
          _
        %s766 = smul.u32 %s25, 16
        %s767 = sshra.s32 %s766, 3
        %s768 = sand.u32 %s766, 7
        %s769 = smul.addr %s767, 4
        %s770 = scalar_lea.vmem %s263, %s769
        %v771 = vld [vmem:[%s770] sm:$0xf]
        %v772 = vld [vmem:[%s770 + $0x4] sm:$0xf]
        %v773 = vld [vmem:[%s1] sm:$0xf]
        %v774 = vld [vmem:[%s1 + $0x4] sm:$0xf]
        %v775 = vld [vmem:[%s1 + $0x8] sm:$0xf]
        %v776 = vld [vmem:[%s1 + $0xc] sm:$0xf]
        %v779 = vunpack.c.l.b16 %v771
        %v780 = vunpack.c.l.b16 %v772
        %v781 = vpack.c.b16 %v780, %v779
        %v786 = vunpack.c.l.b16 %v773
        %v787 = vunpack.c.l.b16 %v774
        %v788 = vunpack.c.l.b16 %v775
        %v789 = vunpack.c.l.b16 %v776
        %v790 = vpack.c.b16 %v787, %v786
        %v791 = vpack.c.b16 %v789, %v788
        %vm794 = vcmask 261120
        %v796 = vsel %vm794, %v781, 0
        %798 = vmatprep.subr.bf16.mxu0 0
        %799 = vmatpush1.bf16.msra.mxu0 %v790
        %800 = vmatprep.subr.bf16.mxu0 0
        %801 = vmatpush1.bf16.msra.mxu0 %v791
        %802 = vmatprep.subr.bf16.mxu0 0
        %803 = vmatpush1.bf16.msra.mxu0 0
        %804 = vmatprep.subr.bf16.mxu0 0
        %805 = vmatpush1.bf16.msra.mxu0 0
        %806 = vmatprep.subr.bf16.mxu0 0
        %807 = vmatpush1.bf16.msra.mxu0 0
        %808 = vmatprep.subr.bf16.mxu0 0
        %809 = vmatpush1.bf16.msra.mxu0 0
        %810 = vmatprep.subr.bf16.mxu0 0
        %811 = vmatpush1.bf16.msra.mxu0 0
        %812 = vmatprep.subr.bf16.mxu0 0
        %813 = vmatpush1.bf16.msra.mxu0 0
        %814 = vmatprep.subr.bf16.mxu0 0
        %815 = vmatpush1.bf16.msra.mxu0 0
        %816 = vmatprep.subr.bf16.mxu0 0
        %817 = vmatpush1.bf16.msra.mxu0 0
        %818 = vmatprep.subr.bf16.mxu0 0
        %819 = vmatpush1.bf16.msra.mxu0 0
        %820 = vmatprep.subr.bf16.mxu0 0
        %821 = vmatpush1.bf16.msra.mxu0 0
        %822 = vmatprep.subr.bf16.mxu0 0
        %823 = vmatpush1.bf16.msra.mxu0 0
        %824 = vmatprep.subr.bf16.mxu0 0
        %825 = vmatpush1.bf16.msra.mxu0 0
        %826 = vmatprep.subr.bf16.mxu0 0
        %827 = vmatpush1.bf16.msra.mxu0 0
        %828 = vmatprep.subr.bf16.mxu0 0
        %829 = vmatpush1.bf16.msra.mxu0 0
        %830 = vmatprep.mubr.bf16.mxu0 0
        %831 = vmatmul.mubr.bf16.gmra.mrb[0].mxu0 %v796
        %v832 = vpop.f32.mrb[0].mxu0
        %v833 = vadd.f32 0.0, %v832
        %v834 = vpop.f32.mrb[0].mxu0
        %v835 = vpop.f32.mrb[0].mxu0
        %v836 = vadd.f32 0.0, %v835
        %v837 = vpop.f32.mrb[0].mxu0
        %838 = vdwg.mxu0
        %v839 = vmul.f32 %v833, 0.35355338
        %v840 = vmul.f32 %v836, 0.35355338
        %v841 = vpack.c.bf16 %v840, %v839
        %v842 = vld [vmem:[#allocation2] sm:$0xff]
        %v843 = vld [vmem:[#allocation3] sm:$0xff]
        %vm844 = vcmask 64512
        %v846 = vsel %vm844, %v841, 0
        %v849 = vsel %vm844, %v842, 0
        %851 = vmatprep.subr.bf16.mxu0 0
        %852 = vmatpush1.bf16.xpose.msra.mxu0 %v849
        %853 = vmatprep.subr.bf16.mxu0 0
        %854 = vmatpush1.bf16.xpose.msra.mxu0 0
        %855 = vmatprep.subr.bf16.mxu0 0
        %856 = vmatpush1.bf16.xpose.msra.mxu0 0
        %857 = vmatprep.subr.bf16.mxu0 0
        %858 = vmatpush1.bf16.xpose.msra.mxu0 0
        %859 = vmatprep.subr.bf16.mxu0 0
        %860 = vmatpush1.bf16.xpose.msra.mxu0 0
        %861 = vmatprep.subr.bf16.mxu0 0
        %862 = vmatpush1.bf16.xpose.msra.mxu0 0
        %863 = vmatprep.subr.bf16.mxu0 0
        %864 = vmatpush1.bf16.xpose.msra.mxu0 0
        %865 = vmatprep.subr.bf16.mxu0 0
        %866 = vmatpush1.bf16.xpose.msra.mxu0 0
        %867 = vmatprep.subr.bf16.mxu0 0
        %868 = vmatpush1.bf16.xpose.msra.mxu0 0
        %869 = vmatprep.subr.bf16.mxu0 0
        %870 = vmatpush1.bf16.xpose.msra.mxu0 0
        %871 = vmatprep.subr.bf16.mxu0 0
        %872 = vmatpush1.bf16.xpose.msra.mxu0 0
        %873 = vmatprep.subr.bf16.mxu0 0
        %874 = vmatpush1.bf16.xpose.msra.mxu0 0
        %875 = vmatprep.subr.bf16.mxu0 0
        %876 = vmatpush1.bf16.xpose.msra.mxu0 0
        %877 = vmatprep.subr.bf16.mxu0 0
        %878 = vmatpush1.bf16.xpose.msra.mxu0 0
        %879 = vmatprep.subr.bf16.mxu0 0
        %880 = vmatpush1.bf16.xpose.msra.mxu0 0
        %881 = vmatprep.subr.bf16.mxu0 0
        %882 = vmatpush1.bf16.xpose.msra.mxu0 0
        %883 = vmatprep.mubr.bf16.mxu0 0
        %884 = vmatmul.mubr.bf16.gmra.mrb[0].mxu0 %v846
        %v885 = vpop.f32.mrb[0].mxu0
        %v886 = vadd.f32 0.0, %v885
        %v887 = vpop.f32.mrb[0].mxu0
        %v888 = vpop.f32.mrb[0].mxu0
        %v889 = vadd.f32 0.0, %v888
        %v890 = vpop.f32.mrb[0].mxu0
        %891 = vdwg.mxu0
        %v892 = vlaneseq
        %v893 = vshrl.u32 %v892, 7
        %v894 = vadd.s32 %v893, 8
        %v895 = vstv %s766
        %v896 = vadd.s32 %v895, %v893
        %v897 = vadd.s32 %v895, %v894
        %v898 = vlaneseq
        %v899 = vand.u32 %v898, 127
        %v900 = vsub.s32 %v896, %v899
        %v901 = vsub.s32 %v897, %v899
        %vm902 = vcmp.lt.s32.totalorder %v900, 0
        %v903 = vsub.s32 0, %v900
        %v904 = vsel %vm902, %v903, %v900
        %vm905 = vcmp.lt.s32.totalorder %v901, 0
        %v906 = vsub.s32 0, %v901
        %v907 = vsel %vm905, %v906, %v901
        %vm908 = vcmp.le.s32.totalorder %v904, 2
        %vm909 = vcmp.le.s32.totalorder %v907, 2
        %v910 = vsel %vm908, %v886, -1e+30
        %v911 = vsel %vm909, %v889, -1e+30
        %vm912 = vcmask 130048
        %v913 = vsel %vm912, %v910, -inf
        %914 = vmax.xlane.f32.xlu0 %v913
        %v915 = vpop.xlane.xlu0 %914
        %v916 = vsel %vm912, %v911, -inf
        %917 = vmax.xlane.f32.xlu0 %v916
        %v918 = vpop.xlane.xlu0 %917
        %v919 = vsub.f32 %v910, %v915
        %v920 = vsub.f32 %v911, %v918
        %v921 = vmul.f32 %v919, 1.442695
        %v922 = vpow.pop %v921
        %v923 = vmul.f32 %v920, 1.442695
        %v924 = vpow.pop %v923
        %v925 = vsel %vm912, %v922, 0.0
        %926 = vadd.xlane.f32.xlu0 %v925
        %v927 = vpop.xlane.xlu0 %926
        %v928 = vsel %vm912, %v924, 0.0
        %929 = vadd.xlane.f32.xlu0 %v928
        %v930 = vpop.xlane.xlu0 %929
        %v931 = vpack.c.bf16 %v924, %v922
        %v933 = vsel %vm912, %v931, 0
        %935 = vmatprep.subr.bf16.mxu0 0
        %936 = vmatpush1.bf16.msra.mxu0 %v843
        %937 = vmatprep.subr.bf16.mxu0 0
        %938 = vmatpush1.bf16.msra.mxu0 0
        %939 = vmatprep.subr.bf16.mxu0 0
        %940 = vmatpush1.bf16.msra.mxu0 0
        %941 = vmatprep.subr.bf16.mxu0 0
        %942 = vmatpush1.bf16.msra.mxu0 0
        %943 = vmatprep.subr.bf16.mxu0 0
        %944 = vmatpush1.bf16.msra.mxu0 0
        %945 = vmatprep.subr.bf16.mxu0 0
        %946 = vmatpush1.bf16.msra.mxu0 0
        %947 = vmatprep.subr.bf16.mxu0 0
        %948 = vmatpush1.bf16.msra.mxu0 0
        %949 = vmatprep.subr.bf16.mxu0 0
        %950 = vmatpush1.bf16.msra.mxu0 0
        %951 = vmatprep.subr.bf16.mxu0 0
        %952 = vmatpush1.bf16.msra.mxu0 0
        %953 = vmatprep.subr.bf16.mxu0 0
        %954 = vmatpush1.bf16.msra.mxu0 0
        %955 = vmatprep.subr.bf16.mxu0 0
        %956 = vmatpush1.bf16.msra.mxu0 0
        %957 = vmatprep.subr.bf16.mxu0 0
        %958 = vmatpush1.bf16.msra.mxu0 0
        %959 = vmatprep.subr.bf16.mxu0 0
        %960 = vmatpush1.bf16.msra.mxu0 0
        %961 = vmatprep.subr.bf16.mxu0 0
        %962 = vmatpush1.bf16.msra.mxu0 0
        %963 = vmatprep.subr.bf16.mxu0 0
        %964 = vmatpush1.bf16.msra.mxu0 0
        %965 = vmatprep.subr.bf16.mxu0 0
        %966 = vmatpush1.bf16.msra.mxu0 0
        %967 = vmatprep.mubr.bf16.mxu0 0
        %968 = vmatmul.mubr.bf16.gmra.mrb[0].mxu0 %v933
        %v969 = vpop.f32.mrb[0].mxu0
        %v970 = vadd.f32 0.0, %v969
        %v971 = vpop.f32.mrb[0].mxu0
        %v972 = vpop.f32.mrb[0].mxu0
        %v973 = vadd.f32 0.0, %v972
        %v974 = vpop.f32.mrb[0].mxu0
        %975 = vdwg.mxu0
        %v976 = vrcp.pop %v927
        %v977 = vmul.f32 %v970, %v976
        %v978 = vrcp.pop %v930
        %v979 = vmul.f32 %v973, %v978
        %v980 = vpack.c.bf16 %v979, %v977
        %v981 = vld [vmem:[%s4] sm:$0xf]
        %s982 = scalar_lea.vmem %s1, 16
        %v983 = vld [vmem:[%s982] sm:$0xf]
        %v984 = vld [vmem:[%s982 + $0x4] sm:$0xf]
        %v985 = vld [vmem:[%s982 + $0x8] sm:$0xf]
        %v986 = vld [vmem:[%s982 + $0xc] sm:$0xf]
        %v991 = vunpack.c.l.b16 %v983
        %v992 = vunpack.c.l.b16 %v984
        %v993 = vunpack.c.l.b16 %v985
        %v994 = vunpack.c.l.b16 %v986
        %v995 = vpack.c.b16 %v992, %v991
        %v996 = vpack.c.b16 %v994, %v993
        %999 = vmatprep.subr.bf16.mxu0 0
        %1000 = vmatpush1.bf16.msra.mxu0 %v995
        %1001 = vmatprep.subr.bf16.mxu0 0
        %1002 = vmatpush1.bf16.msra.mxu0 %v996
        %1003 = vmatprep.subr.bf16.mxu0 0
        %1004 = vmatpush1.bf16.msra.mxu0 0
        %1005 = vmatprep.subr.bf16.mxu0 0
        %1006 = vmatpush1.bf16.msra.mxu0 0
        %1007 = vmatprep.subr.bf16.mxu0 0
        %1008 = vmatpush1.bf16.msra.mxu0 0
        %1009 = vmatprep.subr.bf16.mxu0 0
        %1010 = vmatpush1.bf16.msra.mxu0 0
        %1011 = vmatprep.subr.bf16.mxu0 0
        %1012 = vmatpush1.bf16.msra.mxu0 0
        %1013 = vmatprep.subr.bf16.mxu0 0
        %1014 = vmatpush1.bf16.msra.mxu0 0
        %1015 = vmatprep.subr.bf16.mxu0 0
        %1016 = vmatpush1.bf16.msra.mxu0 0
        %1017 = vmatprep.subr.bf16.mxu0 0
        %1018 = vmatpush1.bf16.msra.mxu0 0
        %1019 = vmatprep.subr.bf16.mxu0 0
        %1020 = vmatpush1.bf16.msra.mxu0 0
        %1021 = vmatprep.subr.bf16.mxu0 0
        %1022 = vmatpush1.bf16.msra.mxu0 0
        %1023 = vmatprep.subr.bf16.mxu0 0
        %1024 = vmatpush1.bf16.msra.mxu0 0
        %1025 = vmatprep.subr.bf16.mxu0 0
        %1026 = vmatpush1.bf16.msra.mxu0 0
        %1027 = vmatprep.subr.bf16.mxu0 0
        %1028 = vmatpush1.bf16.msra.mxu0 0
        %1029 = vmatprep.subr.bf16.mxu0 0
        %1030 = vmatpush1.bf16.msra.mxu0 0
        %1031 = vmatprep.mubr.bf16.mxu0 0
        %1032 = vmatmul.mubr.bf16.gmra.mrb[0].mxu0 %v796
        %v1033 = vpop.f32.mrb[0].mxu0
        %v1034 = vadd.f32 0.0, %v1033
        %v1035 = vpop.f32.mrb[0].mxu0
        %v1036 = vpop.f32.mrb[0].mxu0
        %v1037 = vadd.f32 0.0, %v1036
        %v1038 = vpop.f32.mrb[0].mxu0
        %1039 = vdwg.mxu0
        %v1040 = vmul.f32 %v1034, 0.35355338
        %v1041 = vmul.f32 %v1037, 0.35355338
        %v1042 = vpack.c.bf16 %v1041, %v1040
        %s1043 = scalar_lea.vmem [#allocation2], 8
        %v1044 = vld [vmem:[%s1043] sm:$0xff]
        %s1045 = scalar_lea.vmem [#allocation3], 8
        %v1046 = vld [vmem:[%s1045] sm:$0xff]
        %v1048 = vsel %vm844, %v1042, 0
        %v1051 = vsel %vm844, %v1044, 0
        %1053 = vmatprep.subr.bf16.mxu0 0
        %1054 = vmatpush1.bf16.xpose.msra.mxu0 %v1051
        %1055 = vmatprep.subr.bf16.mxu0 0
        %1056 = vmatpush1.bf16.xpose.msra.mxu0 0
        %1057 = vmatprep.subr.bf16.mxu0 0
        %1058 = vmatpush1.bf16.xpose.msra.mxu0 0
        %1059 = vmatprep.subr.bf16.mxu0 0
        %1060 = vmatpush1.bf16.xpose.msra.mxu0 0
        %1061 = vmatprep.subr.bf16.mxu0 0
        %1062 = vmatpush1.bf16.xpose.msra.mxu0 0
        %1063 = vmatprep.subr.bf16.mxu0 0
        %1064 = vmatpush1.bf16.xpose.msra.mxu0 0
        %1065 = vmatprep.subr.bf16.mxu0 0
        %1066 = vmatpush1.bf16.xpose.msra.mxu0 0
        %1067 = vmatprep.subr.bf16.mxu0 0
        %1068 = vmatpush1.bf16.xpose.msra.mxu0 0
        %1069 = vmatprep.subr.bf16.mxu0 0
        %1070 = vmatpush1.bf16.xpose.msra.mxu0 0
        %1071 = vmatprep.subr.bf16.mxu0 0
        %1072 = vmatpush1.bf16.xpose.msra.mxu0 0
        %1073 = vmatprep.subr.bf16.mxu0 0
        %1074 = vmatpush1.bf16.xpose.msra.mxu0 0
        %1075 = vmatprep.subr.bf16.mxu0 0
        %1076 = vmatpush1.bf16.xpose.msra.mxu0 0
        %1077 = vmatprep.subr.bf16.mxu0 0
        %1078 = vmatpush1.bf16.xpose.msra.mxu0 0
        %1079 = vmatprep.subr.bf16.mxu0 0
        %1080 = vmatpush1.bf16.xpose.msra.mxu0 0
        %1081 = vmatprep.subr.bf16.mxu0 0
        %1082 = vmatpush1.bf16.xpose.msra.mxu0 0
        %1083 = vmatprep.subr.bf16.mxu0 0
        %1084 = vmatpush1.bf16.xpose.msra.mxu0 0
        %1085 = vmatprep.mubr.bf16.mxu0 0
        %1086 = vmatmul.mubr.bf16.gmra.mrb[0].mxu0 %v1048
        %v1087 = vpop.f32.mrb[0].mxu0
        %v1088 = vadd.f32 0.0, %v1087
        %v1089 = vpop.f32.mrb[0].mxu0
        %v1090 = vpop.f32.mrb[0].mxu0
        %v1091 = vadd.f32 0.0, %v1090
        %v1092 = vpop.f32.mrb[0].mxu0
        %1093 = vdwg.mxu0
        %v1094 = vsel %vm908, %v1088, -1e+30
        %v1095 = vsel %vm909, %v1091, -1e+30
        %v1096 = vsel %vm912, %v1094, -inf
        %1097 = vmax.xlane.f32.xlu0 %v1096
        %v1098 = vpop.xlane.xlu0 %1097
        %v1099 = vsel %vm912, %v1095, -inf
        %1100 = vmax.xlane.f32.xlu0 %v1099
        %v1101 = vpop.xlane.xlu0 %1100
        %v1102 = vsub.f32 %v1094, %v1098
        %v1103 = vsub.f32 %v1095, %v1101
        %v1104 = vmul.f32 %v1102, 1.442695
        %v1105 = vpow.pop %v1104
        %v1106 = vmul.f32 %v1103, 1.442695
        %v1107 = vpow.pop %v1106
        %v1108 = vsel %vm912, %v1105, 0.0
        %1109 = vadd.xlane.f32.xlu0 %v1108
        %v1110 = vpop.xlane.xlu0 %1109
        %v1111 = vsel %vm912, %v1107, 0.0
        %1112 = vadd.xlane.f32.xlu0 %v1111
        %v1113 = vpop.xlane.xlu0 %1112
        %v1114 = vpack.c.bf16 %v1107, %v1105
        %v1116 = vsel %vm912, %v1114, 0
        %1118 = vmatprep.subr.bf16.mxu0 0
        %1119 = vmatpush1.bf16.msra.mxu0 %v1046
        %1120 = vmatprep.subr.bf16.mxu0 0
        %1121 = vmatpush1.bf16.msra.mxu0 0
        %1122 = vmatprep.subr.bf16.mxu0 0
        %1123 = vmatpush1.bf16.msra.mxu0 0
        %1124 = vmatprep.subr.bf16.mxu0 0
        %1125 = vmatpush1.bf16.msra.mxu0 0
        %1126 = vmatprep.subr.bf16.mxu0 0
        %1127 = vmatpush1.bf16.msra.mxu0 0
        %1128 = vmatprep.subr.bf16.mxu0 0
        %1129 = vmatpush1.bf16.msra.mxu0 0
        %1130 = vmatprep.subr.bf16.mxu0 0
        %1131 = vmatpush1.bf16.msra.mxu0 0
        %1132 = vmatprep.subr.bf16.mxu0 0
        %1133 = vmatpush1.bf16.msra.mxu0 0
        %1134 = vmatprep.subr.bf16.mxu0 0
        %1135 = vmatpush1.bf16.msra.mxu0 0
        %1136 = vmatprep.subr.bf16.mxu0 0
        %1137 = vmatpush1.bf16.msra.mxu0 0
        %1138 = vmatprep.subr.bf16.mxu0 0
        %1139 = vmatpush1.bf16.msra.mxu0 0
        %1140 = vmatprep.subr.bf16.mxu0 0
        %1141 = vmatpush1.bf16.msra.mxu0 0
        %1142 = vmatprep.subr.bf16.mxu0 0
        %1143 = vmatpush1.bf16.msra.mxu0 0
        %1144 = vmatprep.subr.bf16.mxu0 0
        %1145 = vmatpush1.bf16.msra.mxu0 0
        %1146 = vmatprep.subr.bf16.mxu0 0
        %1147 = vmatpush1.bf16.msra.mxu0 0
        %1148 = vmatprep.subr.bf16.mxu0 0
        %1149 = vmatpush1.bf16.msra.mxu0 0
        %1150 = vmatprep.mubr.bf16.mxu0 0
        %1151 = vmatmul.mubr.bf16.gmra.mrb[0].mxu0 %v1116
        %v1152 = vpop.f32.mrb[0].mxu0
        %v1153 = vadd.f32 0.0, %v1152
        %v1154 = vpop.f32.mrb[0].mxu0
        %v1155 = vpop.f32.mrb[0].mxu0
        %v1156 = vadd.f32 0.0, %v1155
        %v1157 = vpop.f32.mrb[0].mxu0
        %1158 = vdwg.mxu0
        %v1159 = vrcp.pop %v1110
        %v1160 = vmul.f32 %v1153, %v1159
        %v1161 = vrcp.pop %v1113
        %v1162 = vmul.f32 %v1156, %v1161
        %v1163 = vpack.c.bf16 %v1162, %v1160
        %s1164 = scalar_lea.vmem %s4, 4
        %v1165 = vld [vmem:[%s1164] sm:$0xf]
        %v1167 = vsel %vm844, %v1163, 0
        %vm1169 = vcmask 1043456
        %v1171 = vsel %vm1169, %v1165, 0
        %1173 = vmatprep.subr.bf16.mxu0 0
        %1174 = vmatpush1.bf16.msra.mxu0 %v1171
        %1175 = vmatprep.subr.bf16.mxu0 0
        %1176 = vmatpush1.bf16.msra.mxu0 0
        %1177 = vmatprep.subr.bf16.mxu0 0
        %1178 = vmatpush1.bf16.msra.mxu0 0
        %1179 = vmatprep.subr.bf16.mxu0 0
        %1180 = vmatpush1.bf16.msra.mxu0 0
        %1181 = vmatprep.subr.bf16.mxu0 0
        %1182 = vmatpush1.bf16.msra.mxu0 0
        %1183 = vmatprep.subr.bf16.mxu0 0
        %1184 = vmatpush1.bf16.msra.mxu0 0
        %1185 = vmatprep.subr.bf16.mxu0 0
        %1186 = vmatpush1.bf16.msra.mxu0 0
        %1187 = vmatprep.subr.bf16.mxu0 0
        %1188 = vmatpush1.bf16.msra.mxu0 0
        %1189 = vmatprep.subr.bf16.mxu0 0
        %1190 = vmatpush1.bf16.msra.mxu0 0
        %1191 = vmatprep.subr.bf16.mxu0 0
        %1192 = vmatpush1.bf16.msra.mxu0 0
        %1193 = vmatprep.subr.bf16.mxu0 0
        %1194 = vmatpush1.bf16.msra.mxu0 0
        %1195 = vmatprep.subr.bf16.mxu0 0
        %1196 = vmatpush1.bf16.msra.mxu0 0
        %1197 = vmatprep.subr.bf16.mxu0 0
        %1198 = vmatpush1.bf16.msra.mxu0 0
        %1199 = vmatprep.subr.bf16.mxu0 0
        %1200 = vmatpush1.bf16.msra.mxu0 0
        %1201 = vmatprep.subr.bf16.mxu0 0
        %1202 = vmatpush1.bf16.msra.mxu0 0
        %1203 = vmatprep.subr.bf16.mxu0 0
        %1204 = vmatpush1.bf16.msra.mxu0 0
        %1205 = vmatprep.mubr.bf16.mxu0 0
        %1206 = vmatmul.mubr.bf16.gmra.mrb[0].mxu0 %v1167
        %v1207 = vpop.f32.mrb[0].mxu0
        %v1208 = vadd.f32 0.0, %v1207
        %v1209 = vpop.f32.mrb[0].mxu0
        %v1210 = vpop.f32.mrb[0].mxu0
        %v1211 = vadd.f32 0.0, %v1210
        %v1212 = vpop.f32.mrb[0].mxu0
        %1213 = vdwg.mxu0
        %v1215 = vsel %vm844, %v980, 0
        %v1218 = vsel %vm1169, %v981, 0
        %1220 = vmatprep.subr.bf16.mxu0 0
        %1221 = vmatpush1.bf16.msra.mxu0 %v1218
        %1222 = vmatprep.subr.bf16.mxu0 0
        %1223 = vmatpush1.bf16.msra.mxu0 0
        %1224 = vmatprep.subr.bf16.mxu0 0
        %1225 = vmatpush1.bf16.msra.mxu0 0
        %1226 = vmatprep.subr.bf16.mxu0 0
        %1227 = vmatpush1.bf16.msra.mxu0 0
        %1228 = vmatprep.subr.bf16.mxu0 0
        %1229 = vmatpush1.bf16.msra.mxu0 0
        %1230 = vmatprep.subr.bf16.mxu0 0
        %1231 = vmatpush1.bf16.msra.mxu0 0
        %1232 = vmatprep.subr.bf16.mxu0 0
        %1233 = vmatpush1.bf16.msra.mxu0 0
        %1234 = vmatprep.subr.bf16.mxu0 0
        %1235 = vmatpush1.bf16.msra.mxu0 0
        %1236 = vmatprep.subr.bf16.mxu0 0
        %1237 = vmatpush1.bf16.msra.mxu0 0
        %1238 = vmatprep.subr.bf16.mxu0 0
        %1239 = vmatpush1.bf16.msra.mxu0 0
        %1240 = vmatprep.subr.bf16.mxu0 0
        %1241 = vmatpush1.bf16.msra.mxu0 0
        %1242 = vmatprep.subr.bf16.mxu0 0
        %1243 = vmatpush1.bf16.msra.mxu0 0
        %1244 = vmatprep.subr.bf16.mxu0 0
        %1245 = vmatpush1.bf16.msra.mxu0 0
        %1246 = vmatprep.subr.bf16.mxu0 0
        %1247 = vmatpush1.bf16.msra.mxu0 0
        %1248 = vmatprep.subr.bf16.mxu0 0
        %1249 = vmatpush1.bf16.msra.mxu0 0
        %1250 = vmatprep.subr.bf16.mxu0 0
        %1251 = vmatpush1.bf16.msra.mxu0 0
        %1252 = vmatprep.mubr.bf16.mxu0 0
        %1253 = vmatmul.mubr.bf16.gmra.mrb[0].mxu0 %v1215
        %v1254 = vpop.f32.mrb[0].mxu0
        %v1255 = vadd.f32 %v1208, %v1254
        %v1256 = vpop.f32.mrb[0].mxu0
        %v1257 = vpop.f32.mrb[0].mxu0
        %v1258 = vadd.f32 %v1211, %v1257
        %v1259 = vpop.f32.mrb[0].mxu0
        %1260 = vdwg.mxu0
        %s1261 = scalar_lea.vmem %s1, 32
        %v1262 = vld [vmem:[%s1261] sm:$0xf]
        %v1263 = vld [vmem:[%s1261 + $0x4] sm:$0xf]
        %v1264 = vld [vmem:[%s1261 + $0x8] sm:$0xf]
        %v1265 = vld [vmem:[%s1261 + $0xc] sm:$0xf]
        %v1270 = vunpack.c.l.b16 %v1262
        %v1271 = vunpack.c.l.b16 %v1263
        %v1272 = vunpack.c.l.b16 %v1264
        %v1273 = vunpack.c.l.b16 %v1265
        %v1274 = vpack.c.b16 %v1271, %v1270
        %v1275 = vpack.c.b16 %v1273, %v1272
        %1278 = vmatprep.subr.bf16.mxu0 0
        %1279 = vmatpush1.bf16.msra.mxu0 %v1274
        %1280 = vmatprep.subr.bf16.mxu0 0
        %1281 = vmatpush1.bf16.msra.mxu0 %v1275
        %1282 = vmatprep.subr.bf16.mxu0 0
        %1283 = vmatpush1.bf16.msra.mxu0 0
        %1284 = vmatprep.subr.bf16.mxu0 0
        %1285 = vmatpush1.bf16.msra.mxu0 0
        %1286 = vmatprep.subr.bf16.mxu0 0
        %1287 = vmatpush1.bf16.msra.mxu0 0
        %1288 = vmatprep.subr.bf16.mxu0 0
        %1289 = vmatpush1.bf16.msra.mxu0 0
        %1290 = vmatprep.subr.bf16.mxu0 0
        %1291 = vmatpush1.bf16.msra.mxu0 0
        %1292 = vmatprep.subr.bf16.mxu0 0
        %1293 = vmatpush1.bf16.msra.mxu0 0
        %1294 = vmatprep.subr.bf16.mxu0 0
        %1295 = vmatpush1.bf16.msra.mxu0 0
        %1296 = vmatprep.subr.bf16.mxu0 0
        %1297 = vmatpush1.bf16.msra.mxu0 0
        %1298 = vmatprep.subr.bf16.mxu0 0
        %1299 = vmatpush1.bf16.msra.mxu0 0
        %1300 = vmatprep.subr.bf16.mxu0 0
        %1301 = vmatpush1.bf16.msra.mxu0 0
        %1302 = vmatprep.subr.bf16.mxu0 0
        %1303 = vmatpush1.bf16.msra.mxu0 0
        %1304 = vmatprep.subr.bf16.mxu0 0
        %1305 = vmatpush1.bf16.msra.mxu0 0
        %1306 = vmatprep.subr.bf16.mxu0 0
        %1307 = vmatpush1.bf16.msra.mxu0 0
        %1308 = vmatprep.subr.bf16.mxu0 0
        %1309 = vmatpush1.bf16.msra.mxu0 0
        %1310 = vmatprep.mubr.bf16.mxu0 0
        %1311 = vmatmul.mubr.bf16.gmra.mrb[0].mxu0 %v796
        %v1312 = vpop.f32.mrb[0].mxu0
        %v1313 = vadd.f32 0.0, %v1312
        %v1314 = vpop.f32.mrb[0].mxu0
        %v1315 = vpop.f32.mrb[0].mxu0
        %v1316 = vadd.f32 0.0, %v1315
        %v1317 = vpop.f32.mrb[0].mxu0
        %1318 = vdwg.mxu0
        %v1319 = vmul.f32 %v1313, 0.35355338
        %v1320 = vmul.f32 %v1316, 0.35355338
        %v1321 = vpack.c.bf16 %v1320, %v1319
        %s1322 = scalar_lea.vmem [#allocation2], 16
        %v1323 = vld [vmem:[%s1322] sm:$0xff]
        %s1324 = scalar_lea.vmem [#allocation3], 16
        %v1325 = vld [vmem:[%s1324] sm:$0xff]
        %v1327 = vsel %vm844, %v1321, 0
        %v1330 = vsel %vm844, %v1323, 0
        %1332 = vmatprep.subr.bf16.mxu0 0
        %1333 = vmatpush1.bf16.xpose.msra.mxu0 %v1330
        %1334 = vmatprep.subr.bf16.mxu0 0
        %1335 = vmatpush1.bf16.xpose.msra.mxu0 0
        %1336 = vmatprep.subr.bf16.mxu0 0
        %1337 = vmatpush1.bf16.xpose.msra.mxu0 0
        %1338 = vmatprep.subr.bf16.mxu0 0
        %1339 = vmatpush1.bf16.xpose.msra.mxu0 0
        %1340 = vmatprep.subr.bf16.mxu0 0
        %1341 = vmatpush1.bf16.xpose.msra.mxu0 0
        %1342 = vmatprep.subr.bf16.mxu0 0
        %1343 = vmatpush1.bf16.xpose.msra.mxu0 0
        %1344 = vmatprep.subr.bf16.mxu0 0
        %1345 = vmatpush1.bf16.xpose.msra.mxu0 0
        %1346 = vmatprep.subr.bf16.mxu0 0
        %1347 = vmatpush1.bf16.xpose.msra.mxu0 0
        %1348 = vmatprep.subr.bf16.mxu0 0
        %1349 = vmatpush1.bf16.xpose.msra.mxu0 0
        %1350 = vmatprep.subr.bf16.mxu0 0
        %1351 = vmatpush1.bf16.xpose.msra.mxu0 0
        %1352 = vmatprep.subr.bf16.mxu0 0
        %1353 = vmatpush1.bf16.xpose.msra.mxu0 0
        %1354 = vmatprep.subr.bf16.mxu0 0
        %1355 = vmatpush1.bf16.xpose.msra.mxu0 0
        %1356 = vmatprep.subr.bf16.mxu0 0
        %1357 = vmatpush1.bf16.xpose.msra.mxu0 0
        %1358 = vmatprep.subr.bf16.mxu0 0
        %1359 = vmatpush1.bf16.xpose.msra.mxu0 0
        %1360 = vmatprep.subr.bf16.mxu0 0
        %1361 = vmatpush1.bf16.xpose.msra.mxu0 0
        %1362 = vmatprep.subr.bf16.mxu0 0
        %1363 = vmatpush1.bf16.xpose.msra.mxu0 0
        %1364 = vmatprep.mubr.bf16.mxu0 0
        %1365 = vmatmul.mubr.bf16.gmra.mrb[0].mxu0 %v1327
        %v1366 = vpop.f32.mrb[0].mxu0
        %v1367 = vadd.f32 0.0, %v1366
        %v1368 = vpop.f32.mrb[0].mxu0
        %v1369 = vpop.f32.mrb[0].mxu0
        %v1370 = vadd.f32 0.0, %v1369
        %v1371 = vpop.f32.mrb[0].mxu0
        %1372 = vdwg.mxu0
        %v1373 = vsel %vm908, %v1367, -1e+30
        %v1374 = vsel %vm909, %v1370, -1e+30
        %v1375 = vsel %vm912, %v1373, -inf
        %1376 = vmax.xlane.f32.xlu0 %v1375
        %v1377 = vpop.xlane.xlu0 %1376
        %v1378 = vsel %vm912, %v1374, -inf
        %1379 = vmax.xlane.f32.xlu0 %v1378
        %v1380 = vpop.xlane.xlu0 %1379
        %v1381 = vsub.f32 %v1373, %v1377
        %v1382 = vsub.f32 %v1374, %v1380
        %v1383 = vmul.f32 %v1381, 1.442695
        %v1384 = vpow.pop %v1383
        %v1385 = vmul.f32 %v1382, 1.442695
        %v1386 = vpow.pop %v1385
        %v1387 = vsel %vm912, %v1384, 0.0
        %1388 = vadd.xlane.f32.xlu0 %v1387
        %v1389 = vpop.xlane.xlu0 %1388
        %v1390 = vsel %vm912, %v1386, 0.0
        %1391 = vadd.xlane.f32.xlu0 %v1390
        %v1392 = vpop.xlane.xlu0 %1391
        %v1393 = vpack.c.bf16 %v1386, %v1384
        %v1395 = vsel %vm912, %v1393, 0
        %1397 = vmatprep.subr.bf16.mxu0 0
        %1398 = vmatpush1.bf16.msra.mxu0 %v1325
        %1399 = vmatprep.subr.bf16.mxu0 0
        %1400 = vmatpush1.bf16.msra.mxu0 0
        %1401 = vmatprep.subr.bf16.mxu0 0
        %1402 = vmatpush1.bf16.msra.mxu0 0
        %1403 = vmatprep.subr.bf16.mxu0 0
        %1404 = vmatpush1.bf16.msra.mxu0 0
        %1405 = vmatprep.subr.bf16.mxu0 0
        %1406 = vmatpush1.bf16.msra.mxu0 0
        %1407 = vmatprep.subr.bf16.mxu0 0
        %1408 = vmatpush1.bf16.msra.mxu0 0
        %1409 = vmatprep.subr.bf16.mxu0 0
        %1410 = vmatpush1.bf16.msra.mxu0 0
        %1411 = vmatprep.subr.bf16.mxu0 0
        %1412 = vmatpush1.bf16.msra.mxu0 0
        %1413 = vmatprep.subr.bf16.mxu0 0
        %1414 = vmatpush1.bf16.msra.mxu0 0
        %1415 = vmatprep.subr.bf16.mxu0 0
        %1416 = vmatpush1.bf16.msra.mxu0 0
        %1417 = vmatprep.subr.bf16.mxu0 0
        %1418 = vmatpush1.bf16.msra.mxu0 0
        %1419 = vmatprep.subr.bf16.mxu0 0
        %1420 = vmatpush1.bf16.msra.mxu0 0
        %1421 = vmatprep.subr.bf16.mxu0 0
        %1422 = vmatpush1.bf16.msra.mxu0 0
        %1423 = vmatprep.subr.bf16.mxu0 0
        %1424 = vmatpush1.bf16.msra.mxu0 0
        %1425 = vmatprep.subr.bf16.mxu0 0
        %1426 = vmatpush1.bf16.msra.mxu0 0
        %1427 = vmatprep.subr.bf16.mxu0 0
        %1428 = vmatpush1.bf16.msra.mxu0 0
        %1429 = vmatprep.mubr.bf16.mxu0 0
        %1430 = vmatmul.mubr.bf16.gmra.mrb[0].mxu0 %v1395
        %v1431 = vpop.f32.mrb[0].mxu0
        %v1432 = vadd.f32 0.0, %v1431
        %v1433 = vpop.f32.mrb[0].mxu0
        %v1434 = vpop.f32.mrb[0].mxu0
        %v1435 = vadd.f32 0.0, %v1434
        %v1436 = vpop.f32.mrb[0].mxu0
        %1437 = vdwg.mxu0
        %v1438 = vrcp.pop %v1389
        %v1439 = vmul.f32 %v1432, %v1438
        %v1440 = vrcp.pop %v1392
        %v1441 = vmul.f32 %v1435, %v1440
        %v1442 = vpack.c.bf16 %v1441, %v1439
        %s1443 = scalar_lea.vmem %s4, 8
        %v1444 = vld [vmem:[%s1443] sm:$0xf]
        %v1446 = vsel %vm844, %v1442, 0
        %v1449 = vsel %vm1169, %v1444, 0
        %1451 = vmatprep.subr.bf16.mxu0 0
        %1452 = vmatpush1.bf16.msra.mxu0 %v1449
        %1453 = vmatprep.subr.bf16.mxu0 0
        %1454 = vmatpush1.bf16.msra.mxu0 0
        %1455 = vmatprep.subr.bf16.mxu0 0
        %1456 = vmatpush1.bf16.msra.mxu0 0
        %1457 = vmatprep.subr.bf16.mxu0 0
        %1458 = vmatpush1.bf16.msra.mxu0 0
        %1459 = vmatprep.subr.bf16.mxu0 0
        %1460 = vmatpush1.bf16.msra.mxu0 0
        %1461 = vmatprep.subr.bf16.mxu0 0
        %1462 = vmatpush1.bf16.msra.mxu0 0
        %1463 = vmatprep.subr.bf16.mxu0 0
        %1464 = vmatpush1.bf16.msra.mxu0 0
        %1465 = vmatprep.subr.bf16.mxu0 0
        %1466 = vmatpush1.bf16.msra.mxu0 0
        %1467 = vmatprep.subr.bf16.mxu0 0
        %1468 = vmatpush1.bf16.msra.mxu0 0
        %1469 = vmatprep.subr.bf16.mxu0 0
        %1470 = vmatpush1.bf16.msra.mxu0 0
        %1471 = vmatprep.subr.bf16.mxu0 0
        %1472 = vmatpush1.bf16.msra.mxu0 0
        %1473 = vmatprep.subr.bf16.mxu0 0
        %1474 = vmatpush1.bf16.msra.mxu0 0
        %1475 = vmatprep.subr.bf16.mxu0 0
        %1476 = vmatpush1.bf16.msra.mxu0 0
        %1477 = vmatprep.subr.bf16.mxu0 0
        %1478 = vmatpush1.bf16.msra.mxu0 0
        %1479 = vmatprep.subr.bf16.mxu0 0
        %1480 = vmatpush1.bf16.msra.mxu0 0
        %1481 = vmatprep.subr.bf16.mxu0 0
        %1482 = vmatpush1.bf16.msra.mxu0 0
        %1483 = vmatprep.mubr.bf16.mxu0 0
        %1484 = vmatmul.mubr.bf16.gmra.mrb[0].mxu0 %v1446
        %v1485 = vpop.f32.mrb[0].mxu0
        %v1486 = vadd.f32 0.0, %v1485
        %v1487 = vpop.f32.mrb[0].mxu0
        %v1488 = vpop.f32.mrb[0].mxu0
        %v1489 = vadd.f32 0.0, %v1488
        %v1490 = vpop.f32.mrb[0].mxu0
        %1491 = vdwg.mxu0
        %v1492 = vadd.f32 %v1255, %v1486
        %v1493 = vadd.f32 %v1258, %v1489
        %s1494 = scalar_lea.vmem %s1, 48
        %v1495 = vld [vmem:[%s1494] sm:$0xf]
        %v1496 = vld [vmem:[%s1494 + $0x4] sm:$0xf]
        %v1497 = vld [vmem:[%s1494 + $0x8] sm:$0xf]
        %v1498 = vld [vmem:[%s1494 + $0xc] sm:$0xf]
        %v1503 = vunpack.c.l.b16 %v1495
        %v1504 = vunpack.c.l.b16 %v1496
        %v1505 = vunpack.c.l.b16 %v1497
        %v1506 = vunpack.c.l.b16 %v1498
        %v1507 = vpack.c.b16 %v1504, %v1503
        %v1508 = vpack.c.b16 %v1506, %v1505
        %1511 = vmatprep.subr.bf16.mxu0 0
        %1512 = vmatpush1.bf16.msra.mxu0 %v1507
        %1513 = vmatprep.subr.bf16.mxu0 0
        %1514 = vmatpush1.bf16.msra.mxu0 %v1508
        %1515 = vmatprep.subr.bf16.mxu0 0
        %1516 = vmatpush1.bf16.msra.mxu0 0
        %1517 = vmatprep.subr.bf16.mxu0 0
        %1518 = vmatpush1.bf16.msra.mxu0 0
        %1519 = vmatprep.subr.bf16.mxu0 0
        %1520 = vmatpush1.bf16.msra.mxu0 0
        %1521 = vmatprep.subr.bf16.mxu0 0
        %1522 = vmatpush1.bf16.msra.mxu0 0
        %1523 = vmatprep.subr.bf16.mxu0 0
        %1524 = vmatpush1.bf16.msra.mxu0 0
        %1525 = vmatprep.subr.bf16.mxu0 0
        %1526 = vmatpush1.bf16.msra.mxu0 0
        %1527 = vmatprep.subr.bf16.mxu0 0
        %1528 = vmatpush1.bf16.msra.mxu0 0
        %1529 = vmatprep.subr.bf16.mxu0 0
        %1530 = vmatpush1.bf16.msra.mxu0 0
        %1531 = vmatprep.subr.bf16.mxu0 0
        %1532 = vmatpush1.bf16.msra.mxu0 0
        %1533 = vmatprep.subr.bf16.mxu0 0
        %1534 = vmatpush1.bf16.msra.mxu0 0
        %1535 = vmatprep.subr.bf16.mxu0 0
        %1536 = vmatpush1.bf16.msra.mxu0 0
        %1537 = vmatprep.subr.bf16.mxu0 0
        %1538 = vmatpush1.bf16.msra.mxu0 0
        %1539 = vmatprep.subr.bf16.mxu0 0
        %1540 = vmatpush1.bf16.msra.mxu0 0
        %1541 = vmatprep.subr.bf16.mxu0 0
        %1542 = vmatpush1.bf16.msra.mxu0 0
        %1543 = vmatprep.mubr.bf16.mxu0 0
        %1544 = vmatmul.mubr.bf16.gmra.mrb[0].mxu0 %v796
        %v1545 = vpop.f32.mrb[0].mxu0
        %v1546 = vadd.f32 0.0, %v1545
        %v1547 = vpop.f32.mrb[0].mxu0
        %v1548 = vpop.f32.mrb[0].mxu0
        %v1549 = vadd.f32 0.0, %v1548
        %v1550 = vpop.f32.mrb[0].mxu0
        %1551 = vdwg.mxu0
        %v1552 = vmul.f32 %v1546, 0.35355338
        %v1553 = vmul.f32 %v1549, 0.35355338
        %v1554 = vpack.c.bf16 %v1553, %v1552
        %s1555 = scalar_lea.vmem [#allocation2], 24
        %v1556 = vld [vmem:[%s1555] sm:$0xff]
        %s1557 = scalar_lea.vmem [#allocation3], 24
        %v1558 = vld [vmem:[%s1557] sm:$0xff]
        %v1560 = vsel %vm844, %v1554, 0
        %v1563 = vsel %vm844, %v1556, 0
        %1565 = vmatprep.subr.bf16.mxu0 0
        %1566 = vmatpush1.bf16.xpose.msra.mxu0 %v1563
        %1567 = vmatprep.subr.bf16.mxu0 0
        %1568 = vmatpush1.bf16.xpose.msra.mxu0 0
        %1569 = vmatprep.subr.bf16.mxu0 0
        %1570 = vmatpush1.bf16.xpose.msra.mxu0 0
        %1571 = vmatprep.subr.bf16.mxu0 0
        %1572 = vmatpush1.bf16.xpose.msra.mxu0 0
        %1573 = vmatprep.subr.bf16.mxu0 0
        %1574 = vmatpush1.bf16.xpose.msra.mxu0 0
        %1575 = vmatprep.subr.bf16.mxu0 0
        %1576 = vmatpush1.bf16.xpose.msra.mxu0 0
        %1577 = vmatprep.subr.bf16.mxu0 0
        %1578 = vmatpush1.bf16.xpose.msra.mxu0 0
        %1579 = vmatprep.subr.bf16.mxu0 0
        %1580 = vmatpush1.bf16.xpose.msra.mxu0 0
        %1581 = vmatprep.subr.bf16.mxu0 0
        %1582 = vmatpush1.bf16.xpose.msra.mxu0 0
        %1583 = vmatprep.subr.bf16.mxu0 0
        %1584 = vmatpush1.bf16.xpose.msra.mxu0 0
        %1585 = vmatprep.subr.bf16.mxu0 0
        %1586 = vmatpush1.bf16.xpose.msra.mxu0 0
        %1587 = vmatprep.subr.bf16.mxu0 0
        %1588 = vmatpush1.bf16.xpose.msra.mxu0 0
        %1589 = vmatprep.subr.bf16.mxu0 0
        %1590 = vmatpush1.bf16.xpose.msra.mxu0 0
        %1591 = vmatprep.subr.bf16.mxu0 0
        %1592 = vmatpush1.bf16.xpose.msra.mxu0 0
        %1593 = vmatprep.subr.bf16.mxu0 0
        %1594 = vmatpush1.bf16.xpose.msra.mxu0 0
        %1595 = vmatprep.subr.bf16.mxu0 0
        %1596 = vmatpush1.bf16.xpose.msra.mxu0 0
        %1597 = vmatprep.mubr.bf16.mxu0 0
        %1598 = vmatmul.mubr.bf16.gmra.mrb[0].mxu0 %v1560
        %v1599 = vpop.f32.mrb[0].mxu0
        %v1600 = vadd.f32 0.0, %v1599
        %v1601 = vpop.f32.mrb[0].mxu0
        %v1602 = vpop.f32.mrb[0].mxu0
        %v1603 = vadd.f32 0.0, %v1602
        %v1604 = vpop.f32.mrb[0].mxu0
        %1605 = vdwg.mxu0
        %v1606 = vsel %vm908, %v1600, -1e+30
        %v1607 = vsel %vm909, %v1603, -1e+30
        %v1608 = vsel %vm912, %v1606, -inf
        %1609 = vmax.xlane.f32.xlu0 %v1608
        %v1610 = vpop.xlane.xlu0 %1609
        %v1611 = vsel %vm912, %v1607, -inf
        %1612 = vmax.xlane.f32.xlu0 %v1611
        %v1613 = vpop.xlane.xlu0 %1612
        %v1614 = vsub.f32 %v1606, %v1610
        %v1615 = vsub.f32 %v1607, %v1613
        %v1616 = vmul.f32 %v1614, 1.442695
        %v1617 = vpow.pop %v1616
        %v1618 = vmul.f32 %v1615, 1.442695
        %v1619 = vpow.pop %v1618
        %v1620 = vsel %vm912, %v1617, 0.0
        %1621 = vadd.xlane.f32.xlu0 %v1620
        %v1622 = vpop.xlane.xlu0 %1621
        %v1623 = vsel %vm912, %v1619, 0.0
        %1624 = vadd.xlane.f32.xlu0 %v1623
        %v1625 = vpop.xlane.xlu0 %1624
        %v1626 = vpack.c.bf16 %v1619, %v1617
        %v1628 = vsel %vm912, %v1626, 0
        %1630 = vmatprep.subr.bf16.mxu0 0
        %1631 = vmatpush1.bf16.msra.mxu0 %v1558
        %1632 = vmatprep.subr.bf16.mxu0 0
        %1633 = vmatpush1.bf16.msra.mxu0 0
        %1634 = vmatprep.subr.bf16.mxu0 0
        %1635 = vmatpush1.bf16.msra.mxu0 0
        %1636 = vmatprep.subr.bf16.mxu0 0
        %1637 = vmatpush1.bf16.msra.mxu0 0
        %1638 = vmatprep.subr.bf16.mxu0 0
        %1639 = vmatpush1.bf16.msra.mxu0 0
        %1640 = vmatprep.subr.bf16.mxu0 0
        %1641 = vmatpush1.bf16.msra.mxu0 0
        %1642 = vmatprep.subr.bf16.mxu0 0
        %1643 = vmatpush1.bf16.msra.mxu0 0
        %1644 = vmatprep.subr.bf16.mxu0 0
        %1645 = vmatpush1.bf16.msra.mxu0 0
        %1646 = vmatprep.subr.bf16.mxu0 0
        %1647 = vmatpush1.bf16.msra.mxu0 0
        %1648 = vmatprep.subr.bf16.mxu0 0
        %1649 = vmatpush1.bf16.msra.mxu0 0
        %1650 = vmatprep.subr.bf16.mxu0 0
        %1651 = vmatpush1.bf16.msra.mxu0 0
        %1652 = vmatprep.subr.bf16.mxu0 0
        %1653 = vmatpush1.bf16.msra.mxu0 0
        %1654 = vmatprep.subr.bf16.mxu0 0
        %1655 = vmatpush1.bf16.msra.mxu0 0
        %1656 = vmatprep.subr.bf16.mxu0 0
        %1657 = vmatpush1.bf16.msra.mxu0 0
        %1658 = vmatprep.subr.bf16.mxu0 0
        %1659 = vmatpush1.bf16.msra.mxu0 0
        %1660 = vmatprep.subr.bf16.mxu0 0
        %1661 = vmatpush1.bf16.msra.mxu0 0
        %1662 = vmatprep.mubr.bf16.mxu0 0
        %1663 = vmatmul.mubr.bf16.gmra.mrb[0].mxu0 %v1628
        %v1664 = vpop.f32.mrb[0].mxu0
        %v1665 = vadd.f32 0.0, %v1664
        %v1666 = vpop.f32.mrb[0].mxu0
        %v1667 = vpop.f32.mrb[0].mxu0
        %v1668 = vadd.f32 0.0, %v1667
        %v1669 = vpop.f32.mrb[0].mxu0
        %1670 = vdwg.mxu0
        %v1671 = vrcp.pop %v1622
        %v1672 = vmul.f32 %v1665, %v1671
        %v1673 = vrcp.pop %v1625
        %v1674 = vmul.f32 %v1668, %v1673
        %v1675 = vpack.c.bf16 %v1674, %v1672
        %s1676 = scalar_lea.vmem %s4, 12
        %v1677 = vld [vmem:[%s1676] sm:$0xf]
        %v1679 = vsel %vm844, %v1675, 0
        %v1682 = vsel %vm1169, %v1677, 0
        %1684 = vmatprep.subr.bf16.mxu0 0
        %1685 = vmatpush1.bf16.msra.mxu0 %v1682
        %1686 = vmatprep.subr.bf16.mxu0 0
        %1687 = vmatpush1.bf16.msra.mxu0 0
        %1688 = vmatprep.subr.bf16.mxu0 0
        %1689 = vmatpush1.bf16.msra.mxu0 0
        %1690 = vmatprep.subr.bf16.mxu0 0
        %1691 = vmatpush1.bf16.msra.mxu0 0
        %1692 = vmatprep.subr.bf16.mxu0 0
        %1693 = vmatpush1.bf16.msra.mxu0 0
        %1694 = vmatprep.subr.bf16.mxu0 0
        %1695 = vmatpush1.bf16.msra.mxu0 0
        %1696 = vmatprep.subr.bf16.mxu0 0
        %1697 = vmatpush1.bf16.msra.mxu0 0
        %1698 = vmatprep.subr.bf16.mxu0 0
        %1699 = vmatpush1.bf16.msra.mxu0 0
        %1700 = vmatprep.subr.bf16.mxu0 0
        %1701 = vmatpush1.bf16.msra.mxu0 0
        %1702 = vmatprep.subr.bf16.mxu0 0
        %1703 = vmatpush1.bf16.msra.mxu0 0
        %1704 = vmatprep.subr.bf16.mxu0 0
        %1705 = vmatpush1.bf16.msra.mxu0 0
        %1706 = vmatprep.subr.bf16.mxu0 0
        %1707 = vmatpush1.bf16.msra.mxu0 0
        %1708 = vmatprep.subr.bf16.mxu0 0
        %1709 = vmatpush1.bf16.msra.mxu0 0
        %1710 = vmatprep.subr.bf16.mxu0 0
        %1711 = vmatpush1.bf16.msra.mxu0 0
        %1712 = vmatprep.subr.bf16.mxu0 0
        %1713 = vmatpush1.bf16.msra.mxu0 0
        %1714 = vmatprep.subr.bf16.mxu0 0
        %1715 = vmatpush1.bf16.msra.mxu0 0
        %1716 = vmatprep.mubr.bf16.mxu0 0
        %1717 = vmatmul.mubr.bf16.gmra.mrb[0].mxu0 %v1679
        %v1718 = vpop.f32.mrb[0].mxu0
        %v1719 = vadd.f32 0.0, %v1718
        %v1720 = vpop.f32.mrb[0].mxu0
        %v1721 = vpop.f32.mrb[0].mxu0
        %v1722 = vadd.f32 0.0, %v1721
        %v1723 = vpop.f32.mrb[0].mxu0
        %1724 = vdwg.mxu0
        %v1725 = vadd.f32 %v1492, %v1719
        %v1726 = vadd.f32 %v1493, %v1722
        %v1727 = vld [vmem:[%s5] sm:$0x1]
        %v1729 = vlaneseq
        %v1730 = vshrl.u32 %v1729, 7
        %v1731 = vsub.s32 0, %v1730
        %v1732 = vrot.slane %v1727, %v1731
        %v1734 = vadd.f32 %v1725, %v1732
        %v1735 = vadd.f32 %v1726, %v1732
        %1736 = vst.msk [vmem:[%s258] sm:$0xff] %vm794, %v1734
        %1737 = vst.msk [vmem:[%s258 + $0x8] sm:$0xff] %vm794, %v1735
        %s1738 = sand.u32 %s173, 1
        %s1739 = scalar_lea.sflag [#allocation5], %s1738
        %s1740 = sand.u32 %s173, 1
        %s1741 = smul.addr %s1740, 16
        %s1742 = scalar_lea.vmem [#allocation4], %s1741
        // Predicated region
        $region49: #{tpu_custom_call.1} parent=43 // pred_check
          %p1743 = pneg %p183
        $region50: #{tpu_custom_call.1} parent=43 // pred_check_branch
          %1745 = sbr.rel (%p1743) target = $region52
        $region51: #{tpu_custom_call.1} parent=43 // pred_region
          %s1746 = smul.u32 2, %s25
          %s1748 = ssub.s32 256, 256
          %1749 = vsyncadd %s1739, %s1748
          %s1750 = smul.addr %s24, 2
          %s1751 = sadd.s32 %s1746, %s1750
          %s1752 = smul.addr %s1751, 128
          %s1753 = scalar_lea.hbm %s6, %s1752
          %s1754 = sshll.u32 %s1742, 4
          %s1755 = int_to_ptr.vmem [resolvable:$true] %s1754
          %1760 = dma.vmem_to_hbm [thread:$0]  %s1755, 256, %s1753, %s1739, 128, 128, 8
        $region52: #{tpu_custom_call.1} parent=43 // pred_fallthru
          _
      $region44: #{tpu_custom_call.1} parent=5 // pred_fallthru
        _
      %p1761 = scmp.le.s32.totalorder 2, %s15
      // Predicated region
      $region53: #{tpu_custom_call.1} parent=5 // pred_check
        %p1762 = pneg %p1761
      $region54: #{tpu_custom_call.1} parent=5 // pred_check_branch
        %1764 = sbr.rel (%p1762) target = $region56
      $region55: #{tpu_custom_call.1} parent=5 // pred_region
        %s1765 = ssub.s32 %s15, 2
        // Predicated region
        $region57: #{tpu_custom_call.1} parent=55 // pred_check
          %p1766 = pneg %p189
        $region58: #{tpu_custom_call.1} parent=55 // pred_check_branch
          %1768 = sbr.rel (%p1766) target = $region60
        $region59: #{tpu_custom_call.1} parent=55 // pred_region
          %s1769 = sand.u32 %s174, 1
          %s1770 = scalar_lea.sflag [#allocation5], %s1769
          %s1771 = sand.u32 %s174, 1
          %s1772 = smul.addr %s1771, 16
          %s1773 = scalar_lea.vmem [#allocation4], %s1772
          %1774 = dma.done %s1770, 256
        $region60: #{tpu_custom_call.1} parent=55 // pred_fallthru
          _
      $region56: #{tpu_custom_call.1} parent=5 // pred_fallthru
        _
    $region6: #{tpu_custom_call.1} parent=1 // loop_footer
      %s19 = sadd.s32 1, %s15
    $region7: #{tpu_custom_call.1} parent=1 // loop_footer_branch
      %14 = sbr.rel target = $region3
    $region8: #{tpu_custom_call.1} parent=1 // loop_exit
      _
    %1775 = vsyncpa [#allocation5], 1
    %s1776 = scalar_lea.sflag [#allocation5], 1
    %1777 = vsyncpa %s1776, 1

</llo_original>
